<compile_context>
chip_gen: v7x
topology: tpu7x:2x2x1
jax: 0.10.0
libtpu: 0.0.40
codegen_flags: <defaults>
</compile_context>

<pallas_src>
import functools
import math

import jax
import jax.numpy as jnp
from jax import lax
from jax.experimental import pallas as pl
from jax.experimental.pallas import tpu as pltpu


def _mha_kernel(xq_ref, xs_ref, wq_ref, bq_ref, wkv_ref, bkv_ref, wo_ref, bo_ref,
                o_ref, kv_ref, ctx_ref, *, num_heads, depth, d_model):
    # xq_ref:  (TQ, D)  bf16   query rows of this tile
    # xs_ref:  (S, D)   bf16   full sequence of this batch element
    # wq_ref:  (D, D)   bf16   Wq^T * (1/sqrt(depth))
    # bq_ref:  (1, D)   f32    bq   * (1/sqrt(depth))
    # wkv_ref: (D, 2D)  bf16   [Wk^T | Wv^T]
    # bkv_ref: (1, 2D)  f32
    # wo_ref:  (D, D)   bf16   Wo^T
    # bo_ref:  (1, D)   f32
    # o_ref:   (TQ, D)  f32    output rows of this query tile
    # kv_ref:  (S, 2D)  bf16   persistent scratch: K|V of this batch element
    # ctx_ref: (TQ, D)  bf16   per-head context assembly buffer

    # --- K/V projection once per batch element (hoisted out of the qi loop). ---
    @pl.when(pl.program_id(1) == 0)
    def _():
        kv = jnp.dot(xs_ref[...], wkv_ref[...],
                     preferred_element_type=jnp.float32) + bkv_ref[...]
        kv_ref[...] = kv.astype(jnp.bfloat16)

    # --- Q projection for this query tile only (scale pre-folded into Wq/bq). ---
    q = (jnp.dot(xq_ref[...], wq_ref[...],
                 preferred_element_type=jnp.float32) + bq_ref[...]
         ).astype(jnp.bfloat16)                             # (TQ, D)

    k = kv_ref[:, :d_model]                                 # (S, D) bf16
    v = kv_ref[:, d_model:]                                 # (S, D) bf16

    # NOTE: pH (a per-batch scalar added to every logit of a row) cannot change
    # the output because softmax is shift-invariant per row; it is dropped here.

    # Per-head attention; contexts assembled into ctx_ref, one full-width output
    # projection after the loop.
    # TODO(synk): if depth % 128 != 0 at large model sizes, the per-head lane
    # slices below are not vreg-aligned; lay heads out on 128-lane boundaries.
    for h in range(num_heads):                              # H is small; static loop
        lo = h * depth
        hi = lo + depth
        qh = q[:, lo:hi]                                    # (TQ, depth) bf16
        kh = k[:, lo:hi]                                    # (S,  depth) bf16
        vh = v[:, lo:hi]                                    # (S,  depth) bf16

        # logits (TQ, S): contract the depth dims directly -- no K transpose.
        s = lax.dot_general(qh, kh, (((1,), (1,)), ((), ())),
                            preferred_element_type=jnp.float32)

        # Numerically stable softmax with DEFERRED normalization: P@V runs on
        # the unnormalized exp weights, then only the small (TQ, depth) context
        # is scaled by the row-sum reciprocal (EUP, nearly free).
        s = s - jnp.max(s, axis=-1, keepdims=True)
        p = jnp.exp(s)                                      # f32 (portable on v5e)
        denom = jnp.sum(p, axis=-1, keepdims=True)          # (TQ, 1) f32
        ctx_h = jnp.dot(p.astype(jnp.bfloat16), vh,
                        preferred_element_type=jnp.float32)  # (TQ, depth)
        ctx_h = ctx_h * pl.reciprocal(denom, approx=True)
        ctx_ref[:, lo:hi] = ctx_h.astype(jnp.bfloat16)

    # Output projection: a single (TQ, D) @ (D, D) matmul (full-width contraction
    # runs the MXU at full rate, unlike H depth-wide matmuls).
    out = jnp.dot(ctx_ref[...], wo_ref[...],
                  preferred_element_type=jnp.float32) + bo_ref[...]
    o_ref[...] = out.astype(o_ref.dtype)


def prepare_params(params, num_heads):
    """One-time weight prep (transpose / fuse / cast); hoist out of the call path."""
    D = params["wq"].shape[0]
    depth = D // num_heads
    scale = 1.0 / math.sqrt(depth)
    w_q = (params["wq"].T * scale).astype(jnp.bfloat16)                 # (D, D)
    b_q = (params["bq"] * scale).reshape(1, D).astype(jnp.float32)      # (1, D)
    w_kv = jnp.concatenate([params["wk"].T, params["wv"].T],
                           axis=1).astype(jnp.bfloat16)                 # (D, 2D)
    b_kv = jnp.concatenate([params["bk"], params["bv"]]
                           ).reshape(1, 2 * D).astype(jnp.float32)      # (1, 2D)
    w_o = params["wo"].T.astype(jnp.bfloat16)                           # (D, D)
    b_o = params["bo"].reshape(1, D).astype(jnp.float32)                # (1, D)
    return {"w_q": w_q, "b_q": b_q, "w_kv": w_kv, "b_kv": b_kv,
            "w_o": w_o, "b_o": b_o}


def _const_spec(shape):
    """BlockSpec for a weight resident across the whole grid (constant index_map).

    Single-buffered: the second pipeline buffer would be pure VMEM waste.
    Falls back to the default if this JAX version lacks pipeline_mode.
    """
    try:
        return pl.BlockSpec(shape, lambda b, qi: (0, 0),
                            pipeline_mode=pl.Buffered(1))
    except TypeError:
        return pl.BlockSpec(shape, lambda b, qi: (0, 0))


def multihead_attention(x, prepared, pH=None, *, num_heads, tq=None):
    """x: (B, S, D) f32; pH: (B, 1, 1) per-batch scalar logit bias (no-op under softmax)."""
    B, S, D = x.shape
    assert D % num_heads == 0
    depth = D // num_heads
    del pH  # softmax shift-invariance: a per-batch scalar bias never affects the output

    if tq is None:
        # (TQ, S) logits working set: 256 keeps headroom on v7x's 64 MiB VMEM.
        tq = S if S <= 256 else 256
    assert S % tq == 0, "seq_len must be divisible by the query tile size"
    n_q_tiles = S // tq

    x_bf = x.astype(jnp.bfloat16)
    kernel = functools.partial(_mha_kernel, num_heads=num_heads,
                               depth=depth, d_model=D)

    return pl.pallas_call(
        kernel,
        out_shape=jax.ShapeDtypeStruct((B, S, D), jnp.float32),
        grid_spec=pltpu.PrefetchScalarGridSpec(
            num_scalar_prefetch=0,
            grid=(B, n_q_tiles),
            in_specs=[
                pl.BlockSpec((None, tq, D), lambda b, qi: (b, qi, 0)),  # x query tile
                pl.BlockSpec((None, S, D), lambda b, qi: (b, 0, 0)),    # x full seq (K/V)
                _const_spec((D, D)),          # Wq  (scaled)
                _const_spec((1, D)),          # bq  (scaled)
                _const_spec((D, 2 * D)),      # [Wk | Wv]
                _const_spec((1, 2 * D)),      # [bk | bv]
                _const_spec((D, D)),          # Wo
                _const_spec((1, D)),          # bo
            ],
            out_specs=pl.BlockSpec((None, tq, D), lambda b, qi: (b, qi, 0)),
            scratch_shapes=[
                pltpu.VMEM((S, 2 * D), jnp.bfloat16),   # per-batch K|V (persists across qi)
                pltpu.VMEM((tq, D), jnp.bfloat16),      # per-tile head-context buffer
            ],
        ),
        compiler_params=pltpu.CompilerParams(
            # qi must be "arbitrary": the K/V scratch written at qi==0 is reused
            # by later qi steps. B stays "parallel" for megacore sharding.
            dimension_semantics=("parallel", "arbitrary"),
            vmem_limit_bytes=64 * 1024 * 1024),
    )(x_bf, x_bf,
      prepared["w_q"], prepared["b_q"],
      prepared["w_kv"], prepared["b_kv"],
      prepared["w_o"], prepared["b_o"])


def _reference(x, params, pH, num_heads):
    """Pure-JAX reference mirroring the PyTorch forward (eval mode)."""
    B, S, D = x.shape
    depth = D // num_heads

    def lin(x, w, b):
        return x @ w.T + b

    q = lin(x, params["wq"], params["bq"]).reshape(B, S, num_heads, depth).transpose(0, 2, 1, 3)
    k = lin(x, params["wk"], params["bk"]).reshape(B, S, num_heads, depth).transpose(0, 2, 1, 3)
    v = lin(x, params["wv"], params["bv"]).reshape(B, S, num_heads, depth).transpose(0, 2, 1, 3)
    att = jnp.einsum("bhqd,bhkd->bhqk", q, k) / math.sqrt(depth)
    att = att + pH[:, :, :, None]  # (B,1,1,1) broadcast == repeat to (B,H,S,S)
    att = jax.nn.softmax(att, axis=-1)
    ctx = jnp.einsum("bhqk,bhkd->bhqd", att, v)
    ctx = ctx.transpose(0, 2, 1, 3).reshape(B, S, D)
    return lin(ctx, params["wo"], params["bo"])


if __name__ == "__main__":
    B, S, d_model, num_heads = 2, 8, 32, 4
    dropout = 0.1  # identity in eval-mode forward

    key = jax.random.PRNGKey(0)
    keys = jax.random.split(key, 10)

    # deterministic parameter init (PyTorch Linear shapes: W (out,in), b (out,))
    bound = 1.0 / math.sqrt(d_model)
    params = {
        "wq": jax.random.uniform(keys[0], (d_model, d_model), jnp.float32, -bound, bound),
        "bq": jax.random.uniform(keys[1], (d_model,), jnp.float32, -bound, bound),
        "wk": jax.random.uniform(keys[2], (d_model, d_model), jnp.float32, -bound, bound),
        "bk": jax.random.uniform(keys[3], (d_model,), jnp.float32, -bound, bound),
        "wv": jax.random.uniform(keys[4], (d_model, d_model), jnp.float32, -bound, bound),
        "bv": jax.random.uniform(keys[5], (d_model,), jnp.float32, -bound, bound),
        "wo": jax.random.uniform(keys[6], (d_model, d_model), jnp.float32, -bound, bound),
        "bo": jax.random.uniform(keys[7], (d_model,), jnp.float32, -bound, bound),
    }

    x = jax.random.normal(keys[8], (B, S, d_model), jnp.float32)
    # pH: per-batch scalar bias of shape (B, 1, 1); repeated to (B, H, S, S) in torch.
    pH = jax.random.normal(keys[9], (B, 1, 1), jnp.float32)

    prepared = prepare_params(params, num_heads)   # one-time weight prep (model init)

    out = multihead_attention(x, prepared, pH, num_heads=num_heads)
    out = jax.block_until_ready(out)

    ref = _reference(x, params, pH, num_heads)
    assert out.shape == (B, S, d_model)
    # bf16 MXU inputs with f32 accumulation -> looser tolerance than pure f32.
    assert jnp.allclose(out, ref, atol=3e-2, rtol=3e-2), "mismatch vs. JAX reference"

    print("KERNEL_OK")
</pallas_src>

<mosaic_0001>
module attributes {stable_mosaic.version = 11 : i64} {
  func.func @_mha_kernel(%arg0: i32, %arg1: i32, %arg2: memref<1x8x32xbf16, #tpu.memory_space<vmem>>, %arg3: memref<1x8x32xbf16, #tpu.memory_space<vmem>>, %arg4: memref<32x32xbf16, #tpu.memory_space<vmem>>, %arg5: memref<1x32xf32, #tpu.memory_space<vmem>>, %arg6: memref<32x64xbf16, #tpu.memory_space<vmem>>, %arg7: memref<1x64xf32, #tpu.memory_space<vmem>>, %arg8: memref<32x32xbf16, #tpu.memory_space<vmem>>, %arg9: memref<1x32xf32, #tpu.memory_space<vmem>>, %arg10: memref<1x8x32xf32, #tpu.memory_space<vmem>>, %arg11: memref<8x64xbf16, #tpu.memory_space<vmem>>, %arg12: memref<8x32xbf16, #tpu.memory_space<vmem>>) attributes {dimension_semantics = [#tpu.dimension_semantics<parallel>, #tpu.dimension_semantics<arbitrary>], iteration_bounds = array<i64: 2, 1>, scalar_prefetch = 0 : i64, scratch_operands = 2 : i64, tpu.core_type = #tpu.core_type<tc>, window_params = [{transform_indices = @transform_0, window_bounds = array<i64: 1, 8, 32>}, {transform_indices = @transform_1, window_bounds = array<i64: 1, 8, 32>}, {pipeline_mode = #tpu.pipeline_mode<synchronous>, transform_indices = @transform_2, window_bounds = array<i64: 32, 32>}, {pipeline_mode = #tpu.pipeline_mode<synchronous>, transform_indices = @transform_3, window_bounds = array<i64: 1, 32>}, {pipeline_mode = #tpu.pipeline_mode<synchronous>, transform_indices = @transform_4, window_bounds = array<i64: 32, 64>}, {pipeline_mode = #tpu.pipeline_mode<synchronous>, transform_indices = @transform_5, window_bounds = array<i64: 1, 64>}, {pipeline_mode = #tpu.pipeline_mode<synchronous>, transform_indices = @transform_6, window_bounds = array<i64: 32, 32>}, {pipeline_mode = #tpu.pipeline_mode<synchronous>, transform_indices = @transform_7, window_bounds = array<i64: 1, 32>}, {transform_indices = @transform_8, window_bounds = array<i64: 1, 8, 32>}]} {
    %c0_i32 = arith.constant 0 : i32
    %0 = arith.cmpi eq, %arg1, %c0_i32 : i32
    %1 = arith.extui %0 : i1 to i32
    %c0_i32_0 = arith.constant 0 : i32
    %2 = arith.cmpi ne, %1, %c0_i32_0 : i32
    scf.if %2 {
      %c0_41 = arith.constant 0 : index
      %c0_42 = arith.constant 0 : index
      %c0_43 = arith.constant 0 : index
      %94 = vector.load %arg3[%c0_41, %c0_42, %c0_43] : memref<1x8x32xbf16, #tpu.memory_space<vmem>>, vector<1x8x32xbf16>
      %95 = vector.shape_cast %94 : vector<1x8x32xbf16> to vector<8x32xbf16>
      %c0_44 = arith.constant 0 : index
      %c0_45 = arith.constant 0 : index
      %96 = vector.load %arg6[%c0_44, %c0_45] : memref<32x64xbf16, #tpu.memory_space<vmem>>, vector<32x64xbf16>
      %cst_46 = arith.constant dense<0.000000e+00> : vector<8x64xf32>
      %97 = tpu.matmul %95, %96, %cst_46 {dimension_numbers = #tpu.dot_dimension_numbers<[1], [0], [0], [1], [0, 0, 1, 1], [], []>} : vector<8x32xbf16>, vector<32x64xbf16>, vector<8x64xf32> -> vector<8x64xf32>
      %c0_47 = arith.constant 0 : index
      %c0_48 = arith.constant 0 : index
      %98 = vector.load %arg7[%c0_47, %c0_48] : memref<1x64xf32, #tpu.memory_space<vmem>>, vector<1x64xf32>
      %99 = vector.broadcast %98 : vector<1x64xf32> to vector<8x64xf32>
      %100 = arith.addf %97, %99 : vector<8x64xf32>
      %101 = arith.truncf %100 : vector<8x64xf32> to vector<8x64xbf16>
      %c0_49 = arith.constant 0 : index
      %c0_50 = arith.constant 0 : index
      %102 = vector.load %arg11[%c0_49, %c0_50] : memref<8x64xbf16, #tpu.memory_space<vmem>>, vector<8x64xbf16>
      tpu.vector_store %arg11[%c0_49, %c0_50], %101 {strides = array<i32>} : memref<8x64xbf16, #tpu.memory_space<vmem>>, vector<8x64xbf16>,
    } else {
    }
    %c0 = arith.constant 0 : index
    %c0_1 = arith.constant 0 : index
    %c0_2 = arith.constant 0 : index
    %3 = vector.load %arg2[%c0, %c0_1, %c0_2] : memref<1x8x32xbf16, #tpu.memory_space<vmem>>, vector<1x8x32xbf16>
    %4 = vector.shape_cast %3 : vector<1x8x32xbf16> to vector<8x32xbf16>
    %c0_3 = arith.constant 0 : index
    %c0_4 = arith.constant 0 : index
    %5 = vector.load %arg4[%c0_3, %c0_4] : memref<32x32xbf16, #tpu.memory_space<vmem>>, vector<32x32xbf16>
    %cst = arith.constant dense<0.000000e+00> : vector<8x32xf32>
    %6 = tpu.matmul %4, %5, %cst {dimension_numbers = #tpu.dot_dimension_numbers<[1], [0], [0], [1], [0, 0, 1, 1], [], []>} : vector<8x32xbf16>, vector<32x32xbf16>, vector<8x32xf32> -> vector<8x32xf32>
    %c0_5 = arith.constant 0 : index
    %c0_6 = arith.constant 0 : index
    %7 = vector.load %arg5[%c0_5, %c0_6] : memref<1x32xf32, #tpu.memory_space<vmem>>, vector<1x32xf32>
    %8 = vector.broadcast %7 : vector<1x32xf32> to vector<8x32xf32>
    %9 = arith.addf %6, %8 : vector<8x32xf32>
    %10 = arith.truncf %9 : vector<8x32xf32> to vector<8x32xbf16>
    %c0_7 = arith.constant 0 : index
    %c0_8 = arith.constant 0 : index
    %11 = vector.load %arg11[%c0_7, %c0_8] : memref<8x64xbf16, #tpu.memory_space<vmem>>, vector<8x32xbf16>
    %c0_9 = arith.constant 0 : index
    %c32 = arith.constant 32 : index
    %12 = vector.load %arg11[%c0_9, %c32] : memref<8x64xbf16, #tpu.memory_space<vmem>>, vector<8x32xbf16>
    %13 = vector.extract_strided_slice %10 {offsets = [0, 0], sizes = [8, 8], strides = [1, 1]} : vector<8x32xbf16> to vector<8x8xbf16>
    %14 = vector.extract_strided_slice %11 {offsets = [0, 0], sizes = [8, 8], strides = [1, 1]} : vector<8x32xbf16> to vector<8x8xbf16>
    %15 = vector.extract_strided_slice %12 {offsets = [0, 0], sizes = [8, 8], strides = [1, 1]} : vector<8x32xbf16> to vector<8x8xbf16>
    %cst_10 = arith.constant dense<0.000000e+00> : vector<8x8xf32>
    %16 = tpu.matmul %13, %14, %cst_10 {dimension_numbers = #tpu.dot_dimension_numbers<[1], [1], [0], [0], [0, 0, 1, 0], [], []>} : vector<8x8xbf16>, vector<8x8xbf16>, vector<8x8xf32> -> vector<8x8xf32>
    %cst_11 = arith.constant dense<0xFF800000> : vector<8xf32>
    %17 = vector.multi_reduction <maximumf>, %16, %cst_11 [1] : vector<8x8xf32> to vector<8xf32>
    %18 = vector.shape_cast %17 : vector<8xf32> to vector<8x1xf32>
    %19 = vector.broadcast %18 : vector<8x1xf32> to vector<8x8xf32>
    %20 = arith.subf %16, %19 : vector<8x8xf32>
    %21 = math.exp %20 : vector<8x8xf32>
    %cst_12 = arith.constant dense<0.000000e+00> : vector<8xf32>
    %22 = vector.multi_reduction <add>, %21, %cst_12 [1] : vector<8x8xf32> to vector<8xf32>
    %23 = vector.shape_cast %22 : vector<8xf32> to vector<8x1xf32>
    %24 = arith.truncf %21 : vector<8x8xf32> to vector<8x8xbf16>
    %cst_13 = arith.constant dense<0.000000e+00> : vector<8x8xf32>
    %25 = tpu.matmul %24, %15, %cst_13 {dimension_numbers = #tpu.dot_dimension_numbers<[1], [0], [0], [1], [0, 0, 1, 1], [], []>} : vector<8x8xbf16>, vector<8x8xbf16>, vector<8x8xf32> -> vector<8x8xf32>
    %26 = tpu.reciprocal %23 {approx = true} : vector<8x1xf32> -> vector<8x1xf32>
    %27 = vector.broadcast %26 : vector<8x1xf32> to vector<8x8xf32>
    %28 = arith.mulf %25, %27 : vector<8x8xf32>
    %29 = arith.truncf %28 : vector<8x8xf32> to vector<8x8xbf16>
    %c0_14 = arith.constant 0 : index
    %c0_15 = arith.constant 0 : index
    %30 = vector.load %arg12[%c0_14, %c0_15] : memref<8x32xbf16, #tpu.memory_space<vmem>>, vector<8x8xbf16>
    tpu.vector_store %arg12[%c0_14, %c0_15], %29 {strides = array<i32>} : memref<8x32xbf16, #tpu.memory_space<vmem>>, vector<8x8xbf16>,
    %31 = vector.extract_strided_slice %10 {offsets = [0, 8], sizes = [8, 8], strides = [1, 1]} : vector<8x32xbf16> to vector<8x8xbf16>
    %32 = vector.extract_strided_slice %11 {offsets = [0, 8], sizes = [8, 8], strides = [1, 1]} : vector<8x32xbf16> to vector<8x8xbf16>
    %33 = vector.extract_strided_slice %12 {offsets = [0, 8], sizes = [8, 8], strides = [1, 1]} : vector<8x32xbf16> to vector<8x8xbf16>
    %cst_16 = arith.constant dense<0.000000e+00> : vector<8x8xf32>
    %34 = tpu.matmul %31, %32, %cst_16 {dimension_numbers = #tpu.dot_dimension_numbers<[1], [1], [0], [0], [0, 0, 1, 0], [], []>} : vector<8x8xbf16>, vector<8x8xbf16>, vector<8x8xf32> -> vector<8x8xf32>
    %cst_17 = arith.constant dense<0xFF800000> : vector<8xf32>
    %35 = vector.multi_reduction <maximumf>, %34, %cst_17 [1] : vector<8x8xf32> to vector<8xf32>
    %36 = vector.shape_cast %35 : vector<8xf32> to vector<8x1xf32>
    %37 = vector.broadcast %36 : vector<8x1xf32> to vector<8x8xf32>
    %38 = arith.subf %34, %37 : vector<8x8xf32>
    %39 = math.exp %38 : vector<8x8xf32>
    %cst_18 = arith.constant dense<0.000000e+00> : vector<8xf32>
    %40 = vector.multi_reduction <add>, %39, %cst_18 [1] : vector<8x8xf32> to vector<8xf32>
    %41 = vector.shape_cast %40 : vector<8xf32> to vector<8x1xf32>
    %42 = arith.truncf %39 : vector<8x8xf32> to vector<8x8xbf16>
    %cst_19 = arith.constant dense<0.000000e+00> : vector<8x8xf32>
    %43 = tpu.matmul %42, %33, %cst_19 {dimension_numbers = #tpu.dot_dimension_numbers<[1], [0], [0], [1], [0, 0, 1, 1], [], []>} : vector<8x8xbf16>, vector<8x8xbf16>, vector<8x8xf32> -> vector<8x8xf32>
    %44 = tpu.reciprocal %41 {approx = true} : vector<8x1xf32> -> vector<8x1xf32>
    %45 = vector.broadcast %44 : vector<8x1xf32> to vector<8x8xf32>
    %46 = arith.mulf %43, %45 : vector<8x8xf32>
    %47 = arith.truncf %46 : vector<8x8xf32> to vector<8x8xbf16>
    %c0_20 = arith.constant 0 : index
    %c8 = arith.constant 8 : index
    %48 = vector.load %arg12[%c0_20, %c8] : memref<8x32xbf16, #tpu.memory_space<vmem>>, vector<8x8xbf16>
    tpu.vector_store %arg12[%c0_20, %c8], %47 {strides = array<i32>} : memref<8x32xbf16, #tpu.memory_space<vmem>>, vector<8x8xbf16>,
    %49 = vector.extract_strided_slice %10 {offsets = [0, 16], sizes = [8, 8], strides = [1, 1]} : vector<8x32xbf16> to vector<8x8xbf16>
    %50 = vector.extract_strided_slice %11 {offsets = [0, 16], sizes = [8, 8], strides = [1, 1]} : vector<8x32xbf16> to vector<8x8xbf16>
    %51 = vector.extract_strided_slice %12 {offsets = [0, 16], sizes = [8, 8], strides = [1, 1]} : vector<8x32xbf16> to vector<8x8xbf16>
    %cst_21 = arith.constant dense<0.000000e+00> : vector<8x8xf32>
    %52 = tpu.matmul %49, %50, %cst_21 {dimension_numbers = #tpu.dot_dimension_numbers<[1], [1], [0], [0], [0, 0, 1, 0], [], []>} : vector<8x8xbf16>, vector<8x8xbf16>, vector<8x8xf32> -> vector<8x8xf32>
    %cst_22 = arith.constant dense<0xFF800000> : vector<8xf32>
    %53 = vector.multi_reduction <maximumf>, %52, %cst_22 [1] : vector<8x8xf32> to vector<8xf32>
    %54 = vector.shape_cast %53 : vector<8xf32> to vector<8x1xf32>
    %55 = vector.broadcast %54 : vector<8x1xf32> to vector<8x8xf32>
    %56 = arith.subf %52, %55 : vector<8x8xf32>
    %57 = math.exp %56 : vector<8x8xf32>
    %cst_23 = arith.constant dense<0.000000e+00> : vector<8xf32>
    %58 = vector.multi_reduction <add>, %57, %cst_23 [1] : vector<8x8xf32> to vector<8xf32>
    %59 = vector.shape_cast %58 : vector<8xf32> to vector<8x1xf32>
    %60 = arith.truncf %57 : vector<8x8xf32> to vector<8x8xbf16>
    %cst_24 = arith.constant dense<0.000000e+00> : vector<8x8xf32>
    %61 = tpu.matmul %60, %51, %cst_24 {dimension_numbers = #tpu.dot_dimension_numbers<[1], [0], [0], [1], [0, 0, 1, 1], [], []>} : vector<8x8xbf16>, vector<8x8xbf16>, vector<8x8xf32> -> vector<8x8xf32>
    %62 = tpu.reciprocal %59 {approx = true} : vector<8x1xf32> -> vector<8x1xf32>
    %63 = vector.broadcast %62 : vector<8x1xf32> to vector<8x8xf32>
    %64 = arith.mulf %61, %63 : vector<8x8xf32>
    %65 = arith.truncf %64 : vector<8x8xf32> to vector<8x8xbf16>
    %c0_25 = arith.constant 0 : index
    %c16 = arith.constant 16 : index
    %66 = vector.load %arg12[%c0_25, %c16] : memref<8x32xbf16, #tpu.memory_space<vmem>>, vector<8x8xbf16>
    tpu.vector_store %arg12[%c0_25, %c16], %65 {strides = array<i32>} : memref<8x32xbf16, #tpu.memory_space<vmem>>, vector<8x8xbf16>,
    %67 = vector.extract_strided_slice %10 {offsets = [0, 24], sizes = [8, 8], strides = [1, 1]} : vector<8x32xbf16> to vector<8x8xbf16>
    %68 = vector.extract_strided_slice %11 {offsets = [0, 24], sizes = [8, 8], strides = [1, 1]} : vector<8x32xbf16> to vector<8x8xbf16>
    %69 = vector.extract_strided_slice %12 {offsets = [0, 24], sizes = [8, 8], strides = [1, 1]} : vector<8x32xbf16> to vector<8x8xbf16>
    %cst_26 = arith.constant dense<0.000000e+00> : vector<8x8xf32>
    %70 = tpu.matmul %67, %68, %cst_26 {dimension_numbers = #tpu.dot_dimension_numbers<[1], [1], [0], [0], [0, 0, 1, 0], [], []>} : vector<8x8xbf16>, vector<8x8xbf16>, vector<8x8xf32> -> vector<8x8xf32>
    %cst_27 = arith.constant dense<0xFF800000> : vector<8xf32>
    %71 = vector.multi_reduction <maximumf>, %70, %cst_27 [1] : vector<8x8xf32> to vector<8xf32>
    %72 = vector.shape_cast %71 : vector<8xf32> to vector<8x1xf32>
    %73 = vector.broadcast %72 : vector<8x1xf32> to vector<8x8xf32>
    %74 = arith.subf %70, %73 : vector<8x8xf32>
    %75 = math.exp %74 : vector<8x8xf32>
    %cst_28 = arith.constant dense<0.000000e+00> : vector<8xf32>
    %76 = vector.multi_reduction <add>, %75, %cst_28 [1] : vector<8x8xf32> to vector<8xf32>
    %77 = vector.shape_cast %76 : vector<8xf32> to vector<8x1xf32>
    %78 = arith.truncf %75 : vector<8x8xf32> to vector<8x8xbf16>
    %cst_29 = arith.constant dense<0.000000e+00> : vector<8x8xf32>
    %79 = tpu.matmul %78, %69, %cst_29 {dimension_numbers = #tpu.dot_dimension_numbers<[1], [0], [0], [1], [0, 0, 1, 1], [], []>} : vector<8x8xbf16>, vector<8x8xbf16>, vector<8x8xf32> -> vector<8x8xf32>
    %80 = tpu.reciprocal %77 {approx = true} : vector<8x1xf32> -> vector<8x1xf32>
    %81 = vector.broadcast %80 : vector<8x1xf32> to vector<8x8xf32>
    %82 = arith.mulf %79, %81 : vector<8x8xf32>
    %83 = arith.truncf %82 : vector<8x8xf32> to vector<8x8xbf16>
    %c0_30 = arith.constant 0 : index
    %c24 = arith.constant 24 : index
    %84 = vector.load %arg12[%c0_30, %c24] : memref<8x32xbf16, #tpu.memory_space<vmem>>, vector<8x8xbf16>
    tpu.vector_store %arg12[%c0_30, %c24], %83 {strides = array<i32>} : memref<8x32xbf16, #tpu.memory_space<vmem>>, vector<8x8xbf16>,
    %c0_31 = arith.constant 0 : index
    %c0_32 = arith.constant 0 : index
    %85 = vector.load %arg12[%c0_31, %c0_32] : memref<8x32xbf16, #tpu.memory_space<vmem>>, vector<8x32xbf16>
    %c0_33 = arith.constant 0 : index
    %c0_34 = arith.constant 0 : index
    %86 = vector.load %arg8[%c0_33, %c0_34] : memref<32x32xbf16, #tpu.memory_space<vmem>>, vector<32x32xbf16>
    %cst_35 = arith.constant dense<0.000000e+00> : vector<8x32xf32>
    %87 = tpu.matmul %85, %86, %cst_35 {dimension_numbers = #tpu.dot_dimension_numbers<[1], [0], [0], [1], [0, 0, 1, 1], [], []>} : vector<8x32xbf16>, vector<32x32xbf16>, vector<8x32xf32> -> vector<8x32xf32>
    %c0_36 = arith.constant 0 : index
    %c0_37 = arith.constant 0 : index
    %88 = vector.load %arg9[%c0_36, %c0_37] : memref<1x32xf32, #tpu.memory_space<vmem>>, vector<1x32xf32>
    %89 = vector.broadcast %88 : vector<1x32xf32> to vector<8x32xf32>
    %90 = arith.addf %87, %89 : vector<8x32xf32>
    %c0_38 = arith.constant 0 : index
    %c0_39 = arith.constant 0 : index
    %c0_40 = arith.constant 0 : index
    %91 = vector.load %arg10[%c0_38, %c0_39, %c0_40] : memref<1x8x32xf32, #tpu.memory_space<vmem>>, vector<1x8x32xf32>
    %92 = vector.shape_cast %91 : vector<1x8x32xf32> to vector<8x32xf32>
    %93 = vector.shape_cast %90 : vector<8x32xf32> to vector<1x8x32xf32>
    tpu.vector_store %arg10[%c0_38, %c0_39, %c0_40], %93 {strides = array<i32>} : memref<1x8x32xf32, #tpu.memory_space<vmem>>, vector<1x8x32xf32>,
    return
  }
  func.func @transform_0(%arg0: i32, %arg1: i32) -> (i32, i32, i32) {
    %c0_i32 = arith.constant 0 : i32
    %c0_i32_0 = arith.constant 0 : i32
    return %arg0, %arg1, %c0_i32 : i32, i32, i32
  }
  func.func @transform_1(%arg0: i32, %arg1: i32) -> (i32, i32, i32) {
    %c0_i32 = arith.constant 0 : i32
    %c0_i32_0 = arith.constant 0 : i32
    %c0_i32_1 = arith.constant 0 : i32
    return %arg0, %c0_i32, %c0_i32_0 : i32, i32, i32
  }
  func.func @transform_2(%arg0: i32, %arg1: i32) -> (i32, i32) {
    %c0_i32 = arith.constant 0 : i32
    %c0_i32_0 = arith.constant 0 : i32
    %c0_i32_1 = arith.constant 0 : i32
    return %c0_i32, %c0_i32_0 : i32, i32
  }
  func.func @transform_3(%arg0: i32, %arg1: i32) -> (i32, i32) {
    %c0_i32 = arith.constant 0 : i32
    %c0_i32_0 = arith.constant 0 : i32
    %c0_i32_1 = arith.constant 0 : i32
    return %c0_i32, %c0_i32_0 : i32, i32
  }
  func.func @transform_4(%arg0: i32, %arg1: i32) -> (i32, i32) {
    %c0_i32 = arith.constant 0 : i32
    %c0_i32_0 = arith.constant 0 : i32
    %c0_i32_1 = arith.constant 0 : i32
    return %c0_i32, %c0_i32_0 : i32, i32
  }
  func.func @transform_5(%arg0: i32, %arg1: i32) -> (i32, i32) {
    %c0_i32 = arith.constant 0 : i32
    %c0_i32_0 = arith.constant 0 : i32
    %c0_i32_1 = arith.constant 0 : i32
    return %c0_i32, %c0_i32_0 : i32, i32
  }
  func.func @transform_6(%arg0: i32, %arg1: i32) -> (i32, i32) {
    %c0_i32 = arith.constant 0 : i32
    %c0_i32_0 = arith.constant 0 : i32
    %c0_i32_1 = arith.constant 0 : i32
    return %c0_i32, %c0_i32_0 : i32, i32
  }
  func.func @transform_7(%arg0: i32, %arg1: i32) -> (i32, i32) {
    %c0_i32 = arith.constant 0 : i32
    %c0_i32_0 = arith.constant 0 : i32
    %c0_i32_1 = arith.constant 0 : i32
    return %c0_i32, %c0_i32_0 : i32, i32
  }
  func.func @transform_8(%arg0: i32, %arg1: i32) -> (i32, i32, i32) {
    %c0_i32 = arith.constant 0 : i32
    %c0_i32_0 = arith.constant 0 : i32
    return %arg0, %arg1, %c0_i32 : i32, i32, i32
  }
}

</mosaic_0001>

<llo_original>
// kernel: tpu_custom_call.1
$region0: #{tpu_custom_call.1}
  #allocation0 [shape = 'u32[]', space=smem, size = 0x4, offset = 0x4, fixed_abs, tag = 'smem constant byte address 0x4 - core index']
  #allocation1 [shape = 'u32[144,128]{1,0:T(1,128)}', space=vmem, size = 0x12000, scoped, tag = 'internal scratch']
  #allocation2 [shape = 'bf16[8,64]{1,0:T(8,128)(2,1)}', space=vmem, size = 0x800, scoped, tag = 'scratch operand']
  #allocation3 [shape = 'bf16[8,32]{1,0:T(8,128)(2,1)}', space=vmem, size = 0x800, scoped, tag = 'scratch operand']
  %s0 = inlined_call_operand.hbm [shape: bf16[2,8,32], index: 0, kind: input, shape index: {}]
  %s1 = inlined_call_operand.hbm [shape: bf16[2,8,32], index: 1, kind: input, shape index: {}]
  %s2 = inlined_call_operand.hbm [shape: bf16[32,32], index: 2, kind: input, shape index: {}]
  %s3 = inlined_call_operand.hbm [shape: f32[1,32], index: 3, kind: input, shape index: {}]
  %s4 = inlined_call_operand.hbm [shape: bf16[32,64], index: 4, kind: input, shape index: {}]
  %s5 = inlined_call_operand.hbm [shape: f32[1,64], index: 5, kind: input, shape index: {}]
  %s6 = inlined_call_operand.hbm [shape: bf16[32,32], index: 6, kind: input, shape index: {}]
  %s7 = inlined_call_operand.hbm [shape: f32[1,32], index: 7, kind: input, shape index: {}]
  %s8 = inlined_call_operand.hbm [shape: f32[2,8,32], index: 8, kind: output, shape index: {}]
  %s9 = sld [smem:[#allocation0]]
  $region101: #{tpu_custom_call.1} parent=0
    _
  %s11 = ssub.s32 1, %s9
  %s12 = scalar_select 0, %s11, %s9
  $region1: #{tpu_custom_call.1} parent=0
    #allocation4 [shape = 'u8[4096]{0}', space=vmem, size = 0x1000, scoped, tag = 'input window, operand 0']
    #allocation5 [shape = 's32[2]{0}', space=sflag, size = 0x8, scoped, tag = 'scoped memory for tpu_custom_call.1']
    #allocation6 [shape = 's32[2]{0}', space=sflag, size = 0x8, scoped, tag = 'scoped memory for tpu_custom_call.1']
    #allocation7 [shape = 'u8[4096]{0}', space=vmem, size = 0x1000, scoped, tag = 'input window, operand 1']
    #allocation8 [shape = 's32[2]{0}', space=sflag, size = 0x8, scoped, tag = 'scoped memory for tpu_custom_call.1']
    #allocation9 [shape = 'u8[8192]{0}', space=vmem, size = 0x2000, scoped, tag = 'input window, operand 2, single buffered']
    #allocation10 [shape = 'u8[512]{0}', space=vmem, size = 0x400, scoped, tag = 'input window, operand 3, single buffered']
    #allocation11 [shape = 's32[1]{0}', space=sflag, size = 0x4, scoped, tag = 'scoped memory for tpu_custom_call.1']
    #allocation12 [shape = 'u8[8192]{0}', space=vmem, size = 0x2000, scoped, tag = 'input window, operand 4, single buffered']
    #allocation13 [shape = 'u8[512]{0}', space=vmem, size = 0x400, scoped, tag = 'input window, operand 5, single buffered']
    #allocation14 [shape = 's32[1]{0}', space=sflag, size = 0x4, scoped, tag = 'scoped memory for tpu_custom_call.1']
    #allocation15 [shape = 'u8[8192]{0}', space=vmem, size = 0x2000, scoped, tag = 'input window, operand 6, single buffered']
    #allocation16 [shape = 'u8[512]{0}', space=vmem, size = 0x400, scoped, tag = 'input window, operand 7, single buffered']
    #allocation17 [shape = 's32[1]{0}', space=sflag, size = 0x4, scoped, tag = 'scoped memory for tpu_custom_call.1']
    #allocation18 [shape = 'u8[8192]{0}', space=vmem, size = 0x2000, scoped, tag = 'output window, operand 0']
    %13 = vsyncpa [#allocation5], 0
    %s14 = scalar_lea.sflag [#allocation5], 1
    %15 = vsyncpa %s14, 0
    %16 = vsyncpa [#allocation8], 0
    %s17 = scalar_lea.sflag [#allocation8], 1
    %18 = vsyncpa %s17, 0
    %19 = vsyncpa [#allocation11], 0
    %20 = vsyncpa [#allocation14], 0
    %21 = vsyncpa [#allocation17], 0
    %22 = vsyncpa [#allocation6], 0
    %s23 = scalar_lea.sflag [#allocation6], 1
    %24 = vsyncpa %s23, 0
    loop: start=0, step=1, limit=4
    $region2: #{tpu_custom_call.1} parent=1 // loop_pre_header
      _
    $region3: #{tpu_custom_call.1} parent=1 // loop_header
      %s26 = sphi 0, %s30
      %p27 = scmp.ge.s32.totalorder %s26, 4
      %s33 = sphi 0, %s45
      %s34 = sphi 0, %s41
      %s35 = sphi 0, %s33
      %s36 = sphi 0, %s34
      %s37 = sphi 0, %s35
      %s38 = sphi 0, %s36
      %s50 = sphi 0, %s52
      %s53 = sphi 0, %s50
      %s54 = sphi 0, %s53
      %s70 = sphi 0, %s54
      %s76 = sphi 0, %s78
      %s79 = sphi 0, %s76
      %s80 = sphi 0, %s79
      %s96 = sphi 0, %s80
      %s100 = sphi 0, %s100
      %s102 = sphi 0, %s100
      %s103 = sphi 0, %s102
      %s117 = sphi 0, %s103
      %s121 = sphi 0, %s121
      %s123 = sphi 0, %s121
      %s124 = sphi 0, %s123
      %s138 = sphi 0, %s124
      %s142 = sphi 0, %s142
      %s144 = sphi 0, %s142
      %s145 = sphi 0, %s144
      %s159 = sphi 0, %s145
      %s163 = sphi 0, %s163
      %s165 = sphi 0, %s163
      %s166 = sphi 0, %s165
      %s180 = sphi 0, %s166
      %s184 = sphi 0, %s184
      %s186 = sphi 0, %s184
      %s187 = sphi 0, %s186
      %s201 = sphi 0, %s187
      %s205 = sphi 0, %s205
      %s207 = sphi 0, %s205
      %s208 = sphi 0, %s207
      %s222 = sphi 0, %s208
      %s230 = sphi 0, %s232
      %s233 = sphi 0, %s230
      %s234 = sphi 0, %s233
      %s250 = sphi 0, %s234
    $region4: #{tpu_custom_call.1} parent=1 // loop_header_branch
      %29 = sbr.rel (%p27) target = $region8
    $region5: #{tpu_custom_call.1} parent=1 // loop_body
      %s31 = ssub.s32 %s26, 1
      %s32 = ssub.s32 %s26, 2
      %s39 = sadd.s32 1, %s34
      %p40 = scmp.ge.s32.totalorder %s39, 1
      %s41 = scalar_select %p40, 0, %s39
      %s42 = sadd.s32 1, %s33
      %s43 = scalar_select %p40, %s42, %s33
      %p44 = scmp.ge.s32.totalorder %s43, 2
      %s45 = scalar_select %p44, 0, %s43
      %s46 = ssub.s32 %s33, %s45
      %s47 = ssub.s32 %s34, %s41
      %s48 = sor.u32 %s46, %s47
      %p49 = scmp.eq.s32.totalorder %s48, 0
      %s51 = sadd.s32 %s50, 1
      %s52 = scalar_select %p49, %s50, %s51
      %p55 = pneg %p49
      %p56 = scmp.eq.s32.totalorder %s26, 1
      %p57 = por %p55, %p56
      %p58 = scmp.ne.s32.totalorder %s50, %s53
      %p59 = scmp.eq.s32.totalorder %s26, 0
      %p60 = por %p58, %p59
      %p61 = scmp.ne.s32.totalorder %s50, %s53
      %p62 = scmp.eq.s32.totalorder %s31, 1
      %p63 = por %p61, %p62
      %p64 = scmp.ne.s32.totalorder %s53, %s54
      %p65 = scmp.eq.s32.totalorder %s31, 0
      %p66 = por %p64, %p65
      %p67 = scmp.ne.s32.totalorder %s53, %s54
      %p68 = scmp.eq.s32.totalorder %s32, 1
      %p69 = por %p67, %p68
      %p71 = scmp.ne.s32.totalorder %s54, %s70
      %p72 = scmp.eq.s32.totalorder %s32, 0
      %p73 = por %p71, %p72
      %s74 = ssub.s32 %s33, %s45
      %p75 = scmp.eq.s32.totalorder %s74, 0
      %s77 = sadd.s32 %s76, 1
      %s78 = scalar_select %p75, %s76, %s77
      %p81 = pneg %p75
      %p82 = scmp.eq.s32.totalorder %s26, 1
      %p83 = por %p81, %p82
      %p84 = scmp.ne.s32.totalorder %s76, %s79
      %p85 = scmp.eq.s32.totalorder %s26, 0
      %p86 = por %p84, %p85
      %p87 = scmp.ne.s32.totalorder %s76, %s79
      %p88 = scmp.eq.s32.totalorder %s31, 1
      %p89 = por %p87, %p88
      %p90 = scmp.ne.s32.totalorder %s79, %s80
      %p91 = scmp.eq.s32.totalorder %s31, 0
      %p92 = por %p90, %p91
      %p93 = scmp.ne.s32.totalorder %s79, %s80
      %p94 = scmp.eq.s32.totalorder %s32, 1
      %p95 = por %p93, %p94
      %p97 = scmp.ne.s32.totalorder %s80, %s96
      %p98 = scmp.eq.s32.totalorder %s32, 0
      %p99 = por %p97, %p98
      %s101 = sadd.s32 %s100, 1
      %p104 = scmp.eq.s32.totalorder %s26, 1
      %p105 = scmp.ne.s32.totalorder %s100, %s102
      %p106 = scmp.eq.s32.totalorder %s26, 0
      %p107 = por %p105, %p106
      %p108 = scmp.ne.s32.totalorder %s100, %s102
      %p109 = scmp.eq.s32.totalorder %s31, 1
      %p110 = por %p108, %p109
      %p111 = scmp.ne.s32.totalorder %s102, %s103
      %p112 = scmp.eq.s32.totalorder %s31, 0
      %p113 = por %p111, %p112
      %p114 = scmp.ne.s32.totalorder %s102, %s103
      %p115 = scmp.eq.s32.totalorder %s32, 1
      %p116 = por %p114, %p115
      %p118 = scmp.ne.s32.totalorder %s103, %s117
      %p119 = scmp.eq.s32.totalorder %s32, 0
      %p120 = por %p118, %p119
      %s122 = sadd.s32 %s121, 1
      %p125 = scmp.eq.s32.totalorder %s26, 1
      %p126 = scmp.ne.s32.totalorder %s121, %s123
      %p127 = scmp.eq.s32.totalorder %s26, 0
      %p128 = por %p126, %p127
      %p129 = scmp.ne.s32.totalorder %s121, %s123
      %p130 = scmp.eq.s32.totalorder %s31, 1
      %p131 = por %p129, %p130
      %p132 = scmp.ne.s32.totalorder %s123, %s124
      %p133 = scmp.eq.s32.totalorder %s31, 0
      %p134 = por %p132, %p133
      %p135 = scmp.ne.s32.totalorder %s123, %s124
      %p136 = scmp.eq.s32.totalorder %s32, 1
      %p137 = por %p135, %p136
      %p139 = scmp.ne.s32.totalorder %s124, %s138
      %p140 = scmp.eq.s32.totalorder %s32, 0
      %p141 = por %p139, %p140
      %s143 = sadd.s32 %s142, 1
      %p146 = scmp.eq.s32.totalorder %s26, 1
      %p147 = scmp.ne.s32.totalorder %s142, %s144
      %p148 = scmp.eq.s32.totalorder %s26, 0
      %p149 = por %p147, %p148
      %p150 = scmp.ne.s32.totalorder %s142, %s144
      %p151 = scmp.eq.s32.totalorder %s31, 1
      %p152 = por %p150, %p151
      %p153 = scmp.ne.s32.totalorder %s144, %s145
      %p154 = scmp.eq.s32.totalorder %s31, 0
      %p155 = por %p153, %p154
      %p156 = scmp.ne.s32.totalorder %s144, %s145
      %p157 = scmp.eq.s32.totalorder %s32, 1
      %p158 = por %p156, %p157
      %p160 = scmp.ne.s32.totalorder %s145, %s159
      %p161 = scmp.eq.s32.totalorder %s32, 0
      %p162 = por %p160, %p161
      %s164 = sadd.s32 %s163, 1
      %p167 = scmp.eq.s32.totalorder %s26, 1
      %p168 = scmp.ne.s32.totalorder %s163, %s165
      %p169 = scmp.eq.s32.totalorder %s26, 0
      %p170 = por %p168, %p169
      %p171 = scmp.ne.s32.totalorder %s163, %s165
      %p172 = scmp.eq.s32.totalorder %s31, 1
      %p173 = por %p171, %p172
      %p174 = scmp.ne.s32.totalorder %s165, %s166
      %p175 = scmp.eq.s32.totalorder %s31, 0
      %p176 = por %p174, %p175
      %p177 = scmp.ne.s32.totalorder %s165, %s166
      %p178 = scmp.eq.s32.totalorder %s32, 1
      %p179 = por %p177, %p178
      %p181 = scmp.ne.s32.totalorder %s166, %s180
      %p182 = scmp.eq.s32.totalorder %s32, 0
      %p183 = por %p181, %p182
      %s185 = sadd.s32 %s184, 1
      %p188 = scmp.eq.s32.totalorder %s26, 1
      %p189 = scmp.ne.s32.totalorder %s184, %s186
      %p190 = scmp.eq.s32.totalorder %s26, 0
      %p191 = por %p189, %p190
      %p192 = scmp.ne.s32.totalorder %s184, %s186
      %p193 = scmp.eq.s32.totalorder %s31, 1
      %p194 = por %p192, %p193
      %p195 = scmp.ne.s32.totalorder %s186, %s187
      %p196 = scmp.eq.s32.totalorder %s31, 0
      %p197 = por %p195, %p196
      %p198 = scmp.ne.s32.totalorder %s186, %s187
      %p199 = scmp.eq.s32.totalorder %s32, 1
      %p200 = por %p198, %p199
      %p202 = scmp.ne.s32.totalorder %s187, %s201
      %p203 = scmp.eq.s32.totalorder %s32, 0
      %p204 = por %p202, %p203
      %s206 = sadd.s32 %s205, 1
      %p209 = scmp.eq.s32.totalorder %s26, 1
      %p210 = scmp.ne.s32.totalorder %s205, %s207
      %p211 = scmp.eq.s32.totalorder %s26, 0
      %p212 = por %p210, %p211
      %p213 = scmp.ne.s32.totalorder %s205, %s207
      %p214 = scmp.eq.s32.totalorder %s31, 1
      %p215 = por %p213, %p214
      %p216 = scmp.ne.s32.totalorder %s207, %s208
      %p217 = scmp.eq.s32.totalorder %s31, 0
      %p218 = por %p216, %p217
      %p219 = scmp.ne.s32.totalorder %s207, %s208
      %p220 = scmp.eq.s32.totalorder %s32, 1
      %p221 = por %p219, %p220
      %p223 = scmp.ne.s32.totalorder %s208, %s222
      %p224 = scmp.eq.s32.totalorder %s32, 0
      %p225 = por %p223, %p224
      %s226 = ssub.s32 %s33, %s45
      %s227 = ssub.s32 %s34, %s41
      %s228 = sor.u32 %s226, %s227
      %p229 = scmp.eq.s32.totalorder %s228, 0
      %s231 = sadd.s32 %s230, 1
      %s232 = scalar_select %p229, %s230, %s231
      %p235 = pneg %p229
      %p236 = scmp.eq.s32.totalorder %s26, 1
      %p237 = por %p235, %p236
      %p238 = scmp.ne.s32.totalorder %s230, %s233
      %p239 = scmp.eq.s32.totalorder %s26, 0
      %p240 = por %p238, %p239
      %p241 = scmp.ne.s32.totalorder %s230, %s233
      %p242 = scmp.eq.s32.totalorder %s31, 1
      %p243 = por %p241, %p242
      %p244 = scmp.ne.s32.totalorder %s233, %s234
      %p245 = scmp.eq.s32.totalorder %s31, 0
      %p246 = por %p244, %p245
      %p247 = scmp.ne.s32.totalorder %s233, %s234
      %p248 = scmp.eq.s32.totalorder %s32, 1
      %p249 = por %p247, %p248
      %p251 = scmp.ne.s32.totalorder %s234, %s250
      %p252 = scmp.eq.s32.totalorder %s32, 0
      %p253 = por %p251, %p252
      %p254 = scmp.le.s32.totalorder 1, %s26
      %p255 = scmp.lt.s32.totalorder %s26, 3
      %p256 = pnand %p254, %p255
      %p257 = pneg %p256
      // Predicated region
      $region9: #{tpu_custom_call.1} parent=5 // pred_check
        _
      $region10: #{tpu_custom_call.1} parent=5 // pred_check_branch
        %259 = sbr.rel (%p256) target = $region12
      $region11: #{tpu_custom_call.1} parent=5 // pred_region
        %s260 = ssub.s32 %s26, 1
        // Predicated region
        $region13: #{tpu_custom_call.1} parent=11 // pred_check
          %p261 = pneg %p113
        $region14: #{tpu_custom_call.1} parent=11 // pred_check_branch
          %263 = sbr.rel (%p261) target = $region16
        $region15: #{tpu_custom_call.1} parent=11 // pred_region
          %s265 = ssub.s32 256, 256
          %266 = vsyncadd [#allocation8], %s265
          %s267 = sshll.u32 [#allocation9], 4
          %s268 = int_to_ptr.vmem [resolvable:$true] %s267
          %273 = dma.hbm_to_vmem [thread:$0]  %s2, 256, %s268, [#allocation8], 64, 64, 4
        $region16: #{tpu_custom_call.1} parent=11 // pred_fallthru
          _
        // Predicated region
        $region17: #{tpu_custom_call.1} parent=11 // pred_check
          %p274 = pneg %p134
        $region18: #{tpu_custom_call.1} parent=11 // pred_check_branch
          %276 = sbr.rel (%p274) target = $region20
        $region19: #{tpu_custom_call.1} parent=11 // pred_region
          %s278 = ssub.s32 16, 16
          %279 = vsyncadd [#allocation11], %s278
          %s281 = sshll.u32 [#allocation10], 4
          %s282 = int_to_ptr.vmem [resolvable:$true] %s281
          %284 = dma.hbm_to_vmem [thread:$0]  %s3, 16, %s282, [#allocation11]
        $region20: #{tpu_custom_call.1} parent=11 // pred_fallthru
          _
        // Predicated region
        $region21: #{tpu_custom_call.1} parent=11 // pred_check
          %p285 = pneg %p155
        $region22: #{tpu_custom_call.1} parent=11 // pred_check_branch
          %287 = sbr.rel (%p285) target = $region24
        $region23: #{tpu_custom_call.1} parent=11 // pred_region
          %s289 = ssub.s32 256, 256
          %290 = vsyncadd [#allocation11], %s289
          %s291 = sshll.u32 [#allocation12], 4
          %s292 = int_to_ptr.vmem [resolvable:$true] %s291
          %297 = dma.hbm_to_vmem [thread:$0]  %s4, 256, %s292, [#allocation11], 64, 64, 4
        $region24: #{tpu_custom_call.1} parent=11 // pred_fallthru
          _
        // Predicated region
        $region25: #{tpu_custom_call.1} parent=11 // pred_check
          %p298 = pneg %p176
        $region26: #{tpu_custom_call.1} parent=11 // pred_check_branch
          %300 = sbr.rel (%p298) target = $region28
        $region27: #{tpu_custom_call.1} parent=11 // pred_region
          %s302 = ssub.s32 16, 16
          %303 = vsyncadd [#allocation14], %s302
          %s305 = sshll.u32 [#allocation13], 4
          %s306 = int_to_ptr.vmem [resolvable:$true] %s305
          %308 = dma.hbm_to_vmem [thread:$0]  %s5, 16, %s306, [#allocation14]
        $region28: #{tpu_custom_call.1} parent=11 // pred_fallthru
          _
        // Predicated region
        $region29: #{tpu_custom_call.1} parent=11 // pred_check
          %p309 = pneg %p197
        $region30: #{tpu_custom_call.1} parent=11 // pred_check_branch
          %311 = sbr.rel (%p309) target = $region32
        $region31: #{tpu_custom_call.1} parent=11 // pred_region
          %s313 = ssub.s32 256, 256
          %314 = vsyncadd [#allocation14], %s313
          %s315 = sshll.u32 [#allocation15], 4
          %s316 = int_to_ptr.vmem [resolvable:$true] %s315
          %321 = dma.hbm_to_vmem [thread:$0]  %s6, 256, %s316, [#allocation14], 64, 64, 4
        $region32: #{tpu_custom_call.1} parent=11 // pred_fallthru
          _
        // Predicated region
        $region33: #{tpu_custom_call.1} parent=11 // pred_check
          %p322 = pneg %p218
        $region34: #{tpu_custom_call.1} parent=11 // pred_check_branch
          %324 = sbr.rel (%p322) target = $region36
        $region35: #{tpu_custom_call.1} parent=11 // pred_region
          %s326 = ssub.s32 16, 16
          %327 = vsyncadd [#allocation17], %s326
          %s329 = sshll.u32 [#allocation16], 4
          %s330 = int_to_ptr.vmem [resolvable:$true] %s329
          %332 = dma.hbm_to_vmem [thread:$0]  %s7, 16, %s330, [#allocation17]
        $region36: #{tpu_custom_call.1} parent=11 // pred_fallthru
          _
      $region12: #{tpu_custom_call.1} parent=5 // pred_fallthru
        _
      %p333 = scmp.lt.s32.totalorder %s26, 2
      // Predicated region
      $region37: #{tpu_custom_call.1} parent=5 // pred_check
        %p334 = pneg %p333
      $region38: #{tpu_custom_call.1} parent=5 // pred_check_branch
        %336 = sbr.rel (%p334) target = $region40
      $region39: #{tpu_custom_call.1} parent=5 // pred_region
        // Predicated region
        $region41: #{tpu_custom_call.1} parent=39 // pred_check
          %p337 = pneg %p60
        $region42: #{tpu_custom_call.1} parent=39 // pred_check_branch
          %339 = sbr.rel (%p337) target = $region44
        $region43: #{tpu_custom_call.1} parent=39 // pred_region
          %s340 = sand.u32 %s50, 1
          %s341 = scalar_lea.sflag [#allocation5], %s340
          %s342 = sand.u32 %s50, 1
          %s343 = smul.addr %s342, 4
          %s344 = scalar_lea.vmem [#allocation4], %s343
          %s346 = ssub.s32 64, 64
          %347 = vsyncadd %s341, %s346
          %s348 = sadd.s32 %s34, %s33
          %s349 = smul.addr %s348, 64
          %s350 = scalar_lea.hbm %s0, %s349
          %s352 = sshll.u32 %s344, 4
          %s353 = int_to_ptr.vmem [resolvable:$true] %s352
          %355 = dma.hbm_to_vmem [thread:$0]  %s350, 64, %s353, %s341
        $region44: #{tpu_custom_call.1} parent=39 // pred_fallthru
          _
        // Predicated region
        $region45: #{tpu_custom_call.1} parent=39 // pred_check
          %p356 = pneg %p86
        $region46: #{tpu_custom_call.1} parent=39 // pred_check_branch
          %358 = sbr.rel (%p356) target = $region48
        $region47: #{tpu_custom_call.1} parent=39 // pred_region
          %s359 = sand.u32 %s26, 1
          %s360 = scalar_lea.sflag [#allocation8], %s359
          %s361 = sand.u32 %s76, 1
          %s362 = smul.addr %s361, 4
          %s363 = scalar_lea.vmem [#allocation7], %s362
          %s365 = ssub.s32 64, 64
          %366 = vsyncadd %s360, %s365
          %s367 = smul.addr %s33, 64
          %s368 = scalar_lea.hbm %s1, %s367
          %s370 = sshll.u32 %s363, 4
          %s371 = int_to_ptr.vmem [resolvable:$true] %s370
          %373 = dma.hbm_to_vmem [thread:$0]  %s368, 64, %s371, %s360
        $region48: #{tpu_custom_call.1} parent=39 // pred_fallthru
          _
      $region40: #{tpu_custom_call.1} parent=5 // pred_fallthru
        _
      %p374 = scmp.le.s32.totalorder 1, %s26
      %p375 = scmp.lt.s32.totalorder %s26, 3
      %p376 = pnand %p374, %p375
      %p377 = pneg %p376
      // Predicated region
      $region49: #{tpu_custom_call.1} parent=5 // pred_check
        _
      $region50: #{tpu_custom_call.1} parent=5 // pred_check_branch
        %379 = sbr.rel (%p376) target = $region52
      $region51: #{tpu_custom_call.1} parent=5 // pred_region
        %s380 = ssub.s32 %s26, 1
        %s381 = sand.u32 %s53, 1
        %s382 = scalar_lea.sflag [#allocation5], %s381
        %s383 = sand.u32 %s53, 1
        %s384 = smul.addr %s383, 4
        %s385 = scalar_lea.vmem [#allocation4], %s384
        // Predicated region
        $region53: #{tpu_custom_call.1} parent=51 // pred_check
          %p386 = pneg %p66
        $region54: #{tpu_custom_call.1} parent=51 // pred_check_branch
          %388 = sbr.rel (%p386) target = $region56
        $region55: #{tpu_custom_call.1} parent=51 // pred_region
          %389 = dma.done %s382, 64
        $region56: #{tpu_custom_call.1} parent=51 // pred_fallthru
          _
        %s390 = sand.u32 %s31, 1
        %s391 = scalar_lea.sflag [#allocation8], %s390
        %s392 = sand.u32 %s79, 1
        %s393 = smul.addr %s392, 4
        %s394 = scalar_lea.vmem [#allocation7], %s393
        // Predicated region
        $region57: #{tpu_custom_call.1} parent=51 // pred_check
          %p395 = pneg %p92
        $region58: #{tpu_custom_call.1} parent=51 // pred_check_branch
          %397 = sbr.rel (%p395) target = $region60
        $region59: #{tpu_custom_call.1} parent=51 // pred_region
          %398 = dma.done %s391, 64
        $region60: #{tpu_custom_call.1} parent=51 // pred_fallthru
          _
        // Predicated region
        $region61: #{tpu_custom_call.1} parent=51 // pred_check
          %p399 = pneg %p113
        $region62: #{tpu_custom_call.1} parent=51 // pred_check_branch
          %401 = sbr.rel (%p399) target = $region64
        $region63: #{tpu_custom_call.1} parent=51 // pred_region
          %402 = dma.done [#allocation8], 256
        $region64: #{tpu_custom_call.1} parent=51 // pred_fallthru
          _
        // Predicated region
        $region65: #{tpu_custom_call.1} parent=51 // pred_check
          %p403 = pneg %p134
        $region66: #{tpu_custom_call.1} parent=51 // pred_check_branch
          %405 = sbr.rel (%p403) target = $region68
        $region67: #{tpu_custom_call.1} parent=51 // pred_region
          %406 = dma.done [#allocation11], 16
        $region68: #{tpu_custom_call.1} parent=51 // pred_fallthru
          _
        // Predicated region
        $region69: #{tpu_custom_call.1} parent=51 // pred_check
          %p407 = pneg %p155
        $region70: #{tpu_custom_call.1} parent=51 // pred_check_branch
          %409 = sbr.rel (%p407) target = $region72
        $region71: #{tpu_custom_call.1} parent=51 // pred_region
          %410 = dma.done [#allocation11], 256
        $region72: #{tpu_custom_call.1} parent=51 // pred_fallthru
          _
        // Predicated region
        $region73: #{tpu_custom_call.1} parent=51 // pred_check
          %p411 = pneg %p176
        $region74: #{tpu_custom_call.1} parent=51 // pred_check_branch
          %413 = sbr.rel (%p411) target = $region76
        $region75: #{tpu_custom_call.1} parent=51 // pred_region
          %414 = dma.done [#allocation14], 16
        $region76: #{tpu_custom_call.1} parent=51 // pred_fallthru
          _
        // Predicated region
        $region77: #{tpu_custom_call.1} parent=51 // pred_check
          %p415 = pneg %p197
        $region78: #{tpu_custom_call.1} parent=51 // pred_check_branch
          %417 = sbr.rel (%p415) target = $region80
        $region79: #{tpu_custom_call.1} parent=51 // pred_region
          %418 = dma.done [#allocation14], 256
        $region80: #{tpu_custom_call.1} parent=51 // pred_fallthru
          _
        // Predicated region
        $region81: #{tpu_custom_call.1} parent=51 // pred_check
          %p419 = pneg %p218
        $region82: #{tpu_custom_call.1} parent=51 // pred_check_branch
          %421 = sbr.rel (%p419) target = $region84
        $region83: #{tpu_custom_call.1} parent=51 // pred_region
          %422 = dma.done [#allocation17], 16
        $region84: #{tpu_custom_call.1} parent=51 // pred_fallthru
          _
        %s423 = sand.u32 %s53, 1
        %s424 = scalar_lea.sflag [#allocation5], %s423
        %s425 = sand.u32 %s53, 1
        %s426 = smul.addr %s425, 4
        %s427 = scalar_lea.vmem [#allocation4], %s426
        %p428 = pneg %p66
        %p429 = pneg %p63
        %s430 = sand.u32 %s31, 1
        %s431 = scalar_lea.sflag [#allocation8], %s430
        %s432 = sand.u32 %s79, 1
        %s433 = smul.addr %s432, 4
        %s434 = scalar_lea.vmem [#allocation7], %s433
        %p435 = pneg %p92
        %p436 = pneg %p89
        %p437 = pneg %p113
        %p438 = pneg %p110
        %p439 = pneg %p134
        %p440 = pneg %p131
        %p441 = pneg %p155
        %p442 = pneg %p152
        %p443 = pneg %p176
        %p444 = pneg %p173
        %p445 = pneg %p197
        %p446 = pneg %p194
        %p447 = pneg %p218
        %p448 = pneg %p215
        %p449 = pneg %p246
        %p450 = pneg %p243
        %s451 = sand.u32 %s233, 1
        %s452 = scalar_lea.sflag [#allocation6], %s451
        %s453 = sand.u32 %s233, 1
        %s454 = smul.addr %s453, 8
        %s455 = scalar_lea.vmem [#allocation18], %s454
        %p457 = scmp.eq.s32.totalorder %s36, 0
        // Predicated region
        $region85: #{tpu_custom_call.1} parent=51 // pred_check
          %p458 = pneg %p457
        $region86: #{tpu_custom_call.1} parent=51 // pred_check_branch
          %460 = sbr.rel (%p458) target = $region88
        $region87: #{tpu_custom_call.1} parent=51 // pred_region
          %v461 = vld [vmem:[%s394] sm:$0xf]
          %v462 = vld [vmem:[#allocation12] sm:$0xf]
          %v463 = vld [vmem:[#allocation12 + $0x4] sm:$0xf]
          %v464 = vld [vmem:[#allocation12 + $0x8] sm:$0xf]
          %v465 = vld [vmem:[#allocation12 + $0xc] sm:$0xf]
          %v466 = vld [vmem:[#allocation13] sm:$0x1]
          %v468 = vlaneseq
          %v469 = vshrl.u32 %v468, 7
          %v470 = vsub.s32 0, %v469
          %v471 = vrot.slane %v466, %v470
          %v477 = vunpack.c.l.b16 %v462
          %v478 = vunpack.c.l.b16 %v463
          %v479 = vunpack.c.l.b16 %v464
          %v480 = vunpack.c.l.b16 %v465
          %v481 = vpack.c.b16 %v478, %v477
          %v482 = vpack.c.b16 %v480, %v479
          %vm485 = vcmask 261120
          %v487 = vsel %vm485, %v461, 0
          %489 = vmatprep.subr.bf16.mxu0 0
          %490 = vmatpush1.bf16.msra.mxu0 %v481
          %491 = vmatprep.subr.bf16.mxu0 0
          %492 = vmatpush1.bf16.msra.mxu0 %v482
          %493 = vmatprep.subr.bf16.mxu0 0
          %494 = vmatpush1.bf16.msra.mxu0 0
          %495 = vmatprep.subr.bf16.mxu0 0
          %496 = vmatpush1.bf16.msra.mxu0 0
          %497 = vmatprep.subr.bf16.mxu0 0
          %498 = vmatpush1.bf16.msra.mxu0 0
          %499 = vmatprep.subr.bf16.mxu0 0
          %500 = vmatpush1.bf16.msra.mxu0 0
          %501 = vmatprep.subr.bf16.mxu0 0
          %502 = vmatpush1.bf16.msra.mxu0 0
          %503 = vmatprep.subr.bf16.mxu0 0
          %504 = vmatpush1.bf16.msra.mxu0 0
          %505 = vmatprep.subr.bf16.mxu0 0
          %506 = vmatpush1.bf16.msra.mxu0 0
          %507 = vmatprep.subr.bf16.mxu0 0
          %508 = vmatpush1.bf16.msra.mxu0 0
          %509 = vmatprep.subr.bf16.mxu0 0
          %510 = vmatpush1.bf16.msra.mxu0 0
          %511 = vmatprep.subr.bf16.mxu0 0
          %512 = vmatpush1.bf16.msra.mxu0 0
          %513 = vmatprep.subr.bf16.mxu0 0
          %514 = vmatpush1.bf16.msra.mxu0 0
          %515 = vmatprep.subr.bf16.mxu0 0
          %516 = vmatpush1.bf16.msra.mxu0 0
          %517 = vmatprep.subr.bf16.mxu0 0
          %518 = vmatpush1.bf16.msra.mxu0 0
          %519 = vmatprep.subr.bf16.mxu0 0
          %520 = vmatpush1.bf16.msra.mxu0 0
          %521 = vmatprep.mubr.bf16.mxu0 0
          %522 = vmatmul.mubr.bf16.gmra.mrb[0].mxu0 %v487
          %v523 = vpop.f32.mrb[0].mxu0
          %v524 = vadd.f32 %v471, %v523
          %v525 = vpop.f32.mrb[0].mxu0
          %v526 = vpop.f32.mrb[0].mxu0
          %v527 = vpop.f32.mrb[0].mxu0
          %528 = vdwg.mxu0
          %v529 = vpack.c.bf16 %v524, %v524
          %vm530 = vcmask 519168
          %531 = vst.msk [vmem:[#allocation2] sm:$0xf] %vm530, %v529
        $region88: #{tpu_custom_call.1} parent=51 // pred_fallthru
          _
        %v532 = vld [vmem:[%s385] sm:$0xf]
        %v533 = vld [vmem:[#allocation9] sm:$0xf]
        %v534 = vld [vmem:[#allocation9 + $0x4] sm:$0xf]
        %v535 = vld [vmem:[#allocation9 + $0x8] sm:$0xf]
        %v536 = vld [vmem:[#allocation9 + $0xc] sm:$0xf]
        %v537 = vld [vmem:[#allocation10] sm:$0x1]
        %v539 = vlaneseq
        %v540 = vshrl.u32 %v539, 7
        %v541 = vsub.s32 0, %v540
        %v542 = vrot.slane %v537, %v541
        %v548 = vunpack.c.l.b16 %v533
        %v549 = vunpack.c.l.b16 %v534
        %v550 = vunpack.c.l.b16 %v535
        %v551 = vunpack.c.l.b16 %v536
        %v552 = vpack.c.b16 %v549, %v548
        %v553 = vpack.c.b16 %v551, %v550
        %vm556 = vcmask 261120
        %v558 = vsel %vm556, %v532, 0
        %560 = vmatprep.subr.bf16.mxu0 0
        %561 = vmatpush1.bf16.msra.mxu0 %v552
        %562 = vmatprep.subr.bf16.mxu0 0
        %563 = vmatpush1.bf16.msra.mxu0 %v553
        %564 = vmatprep.subr.bf16.mxu0 0
        %565 = vmatpush1.bf16.msra.mxu0 0
        %566 = vmatprep.subr.bf16.mxu0 0
        %567 = vmatpush1.bf16.msra.mxu0 0
        %568 = vmatprep.subr.bf16.mxu0 0
        %569 = vmatpush1.bf16.msra.mxu0 0
        %570 = vmatprep.subr.bf16.mxu0 0
        %571 = vmatpush1.bf16.msra.mxu0 0
        %572 = vmatprep.subr.bf16.mxu0 0
        %573 = vmatpush1.bf16.msra.mxu0 0
        %574 = vmatprep.subr.bf16.mxu0 0
        %575 = vmatpush1.bf16.msra.mxu0 0
        %576 = vmatprep.subr.bf16.mxu0 0
        %577 = vmatpush1.bf16.msra.mxu0 0
        %578 = vmatprep.subr.bf16.mxu0 0
        %579 = vmatpush1.bf16.msra.mxu0 0
        %580 = vmatprep.subr.bf16.mxu0 0
        %581 = vmatpush1.bf16.msra.mxu0 0
        %582 = vmatprep.subr.bf16.mxu0 0
        %583 = vmatpush1.bf16.msra.mxu0 0
        %584 = vmatprep.subr.bf16.mxu0 0
        %585 = vmatpush1.bf16.msra.mxu0 0
        %586 = vmatprep.subr.bf16.mxu0 0
        %587 = vmatpush1.bf16.msra.mxu0 0
        %588 = vmatprep.subr.bf16.mxu0 0
        %589 = vmatpush1.bf16.msra.mxu0 0
        %590 = vmatprep.subr.bf16.mxu0 0
        %591 = vmatpush1.bf16.msra.mxu0 0
        %592 = vmatprep.mubr.bf16.mxu0 0
        %593 = vmatmul.mubr.bf16.gmra.mrb[0].mxu0 %v558
        %v594 = vpop.f32.mrb[0].mxu0
        %v595 = vadd.f32 %v542, %v594
        %v596 = vpop.f32.mrb[0].mxu0
        %v597 = vpop.f32.mrb[0].mxu0
        %v598 = vpop.f32.mrb[0].mxu0
        %599 = vdwg.mxu0
        %v600 = vpack.c.bf16 %v595, %v595
        %v601 = vld [vmem:[#allocation2] sm:$0xf]
        %vm602 = vcmask 64512
        %v604 = vsel %vm602, %v600, 0
        %v607 = vsel %vm602, %v601, 0
        %609 = vmatprep.subr.bf16.mxu0 0
        %610 = vmatpush1.bf16.xpose.msra.mxu0 %v607
        %611 = vmatprep.subr.bf16.mxu0 0
        %612 = vmatpush1.bf16.xpose.msra.mxu0 0
        %613 = vmatprep.subr.bf16.mxu0 0
        %614 = vmatpush1.bf16.xpose.msra.mxu0 0
        %615 = vmatprep.subr.bf16.mxu0 0
        %616 = vmatpush1.bf16.xpose.msra.mxu0 0
        %617 = vmatprep.subr.bf16.mxu0 0
        %618 = vmatpush1.bf16.xpose.msra.mxu0 0
        %619 = vmatprep.subr.bf16.mxu0 0
        %620 = vmatpush1.bf16.xpose.msra.mxu0 0
        %621 = vmatprep.subr.bf16.mxu0 0
        %622 = vmatpush1.bf16.xpose.msra.mxu0 0
        %623 = vmatprep.subr.bf16.mxu0 0
        %624 = vmatpush1.bf16.xpose.msra.mxu0 0
        %625 = vmatprep.subr.bf16.mxu0 0
        %626 = vmatpush1.bf16.xpose.msra.mxu0 0
        %627 = vmatprep.subr.bf16.mxu0 0
        %628 = vmatpush1.bf16.xpose.msra.mxu0 0
        %629 = vmatprep.subr.bf16.mxu0 0
        %630 = vmatpush1.bf16.xpose.msra.mxu0 0
        %631 = vmatprep.subr.bf16.mxu0 0
        %632 = vmatpush1.bf16.xpose.msra.mxu0 0
        %633 = vmatprep.subr.bf16.mxu0 0
        %634 = vmatpush1.bf16.xpose.msra.mxu0 0
        %635 = vmatprep.subr.bf16.mxu0 0
        %636 = vmatpush1.bf16.xpose.msra.mxu0 0
        %637 = vmatprep.subr.bf16.mxu0 0
        %638 = vmatpush1.bf16.xpose.msra.mxu0 0
        %639 = vmatprep.subr.bf16.mxu0 0
        %640 = vmatpush1.bf16.xpose.msra.mxu0 0
        %641 = vmatprep.mubr.bf16.mxu0 0
        %642 = vmatmul.mubr.bf16.gmra.mrb[0].mxu0 %v604
        %v643 = vpop.f32.mrb[0].mxu0
        %v644 = vadd.f32 0.0, %v643
        %v645 = vpop.f32.mrb[0].mxu0
        %v646 = vpop.f32.mrb[0].mxu0
        %v647 = vpop.f32.mrb[0].mxu0
        %648 = vdwg.mxu0
        %v649 = vsel %vm602, %v644, -inf
        %650 = vmax.xlane.f32.xlu0 %v649
        %v651 = vpop.xlane.xlu0 %650
        %v652 = vsub.f32 %v644, %v651
        %v653 = vmul.f32 %v652, 1.442695
        %v654 = vpow.pop %v653
        %v655 = vsel %vm602, %v654, 0.0
        %656 = vadd.xlane.f32.xlu0 %v655
        %v657 = vpop.xlane.xlu0 %656
        %v658 = vpack.c.bf16 %v654, %v654
        %v660 = vunpack.c.l.b16 %v601
        %v661 = vpack.c.b16 %v660, %v660
        %662 = vrot.lane.b32.xlu0 %v661, 96
        %v663 = vpop.permute.xlu0 %662
        %v665 = vsel %vm602, %v658, 0
        %vm667 = vcmask 1043456
        %v669 = vsel %vm667, %v663, 0
        %671 = vmatprep.subr.bf16.mxu0 0
        %672 = vmatpush1.bf16.msra.mxu0 %v669
        %673 = vmatprep.subr.bf16.mxu0 0
        %674 = vmatpush1.bf16.msra.mxu0 0
        %675 = vmatprep.subr.bf16.mxu0 0
        %676 = vmatpush1.bf16.msra.mxu0 0
        %677 = vmatprep.subr.bf16.mxu0 0
        %678 = vmatpush1.bf16.msra.mxu0 0
        %679 = vmatprep.subr.bf16.mxu0 0
        %680 = vmatpush1.bf16.msra.mxu0 0
        %681 = vmatprep.subr.bf16.mxu0 0
        %682 = vmatpush1.bf16.msra.mxu0 0
        %683 = vmatprep.subr.bf16.mxu0 0
        %684 = vmatpush1.bf16.msra.mxu0 0
        %685 = vmatprep.subr.bf16.mxu0 0
        %686 = vmatpush1.bf16.msra.mxu0 0
        %687 = vmatprep.subr.bf16.mxu0 0
        %688 = vmatpush1.bf16.msra.mxu0 0
        %689 = vmatprep.subr.bf16.mxu0 0
        %690 = vmatpush1.bf16.msra.mxu0 0
        %691 = vmatprep.subr.bf16.mxu0 0
        %692 = vmatpush1.bf16.msra.mxu0 0
        %693 = vmatprep.subr.bf16.mxu0 0
        %694 = vmatpush1.bf16.msra.mxu0 0
        %695 = vmatprep.subr.bf16.mxu0 0
        %696 = vmatpush1.bf16.msra.mxu0 0
        %697 = vmatprep.subr.bf16.mxu0 0
        %698 = vmatpush1.bf16.msra.mxu0 0
        %699 = vmatprep.subr.bf16.mxu0 0
        %700 = vmatpush1.bf16.msra.mxu0 0
        %701 = vmatprep.subr.bf16.mxu0 0
        %702 = vmatpush1.bf16.msra.mxu0 0
        %703 = vmatprep.mubr.bf16.mxu0 0
        %704 = vmatmul.mubr.bf16.gmra.mrb[0].mxu0 %v665
        %v705 = vpop.f32.mrb[0].mxu0
        %v706 = vadd.f32 0.0, %v705
        %v707 = vpop.f32.mrb[0].mxu0
        %v708 = vpop.f32.mrb[0].mxu0
        %v709 = vpop.f32.mrb[0].mxu0
        %710 = vdwg.mxu0
        %v711 = vrcp.pop %v657
        %v712 = vmul.f32 %v706, %v711
        %v713 = vpack.c.bf16 %v712, %v712
        %vm714 = vcmask 60416
        %715 = vst.msk [vmem:[#allocation3] sm:$0xf] %vm714, %v713
        %717 = vrot.lane.b32.xlu0 %v600, 120
        %v718 = vpop.permute.xlu0 %717
        %719 = vrot.lane.b32.xlu0 %v661, 120
        %v720 = vpop.permute.xlu0 %719
        %v722 = vsel %vm602, %v718, 0
        %v725 = vsel %vm602, %v720, 0
        %727 = vmatprep.subr.bf16.mxu0 0
        %728 = vmatpush1.bf16.xpose.msra.mxu0 %v725
        %729 = vmatprep.subr.bf16.mxu0 0
        %730 = vmatpush1.bf16.xpose.msra.mxu0 0
        %731 = vmatprep.subr.bf16.mxu0 0
        %732 = vmatpush1.bf16.xpose.msra.mxu0 0
        %733 = vmatprep.subr.bf16.mxu0 0
        %734 = vmatpush1.bf16.xpose.msra.mxu0 0
        %735 = vmatprep.subr.bf16.mxu0 0
        %736 = vmatpush1.bf16.xpose.msra.mxu0 0
        %737 = vmatprep.subr.bf16.mxu0 0
        %738 = vmatpush1.bf16.xpose.msra.mxu0 0
        %739 = vmatprep.subr.bf16.mxu0 0
        %740 = vmatpush1.bf16.xpose.msra.mxu0 0
        %741 = vmatprep.subr.bf16.mxu0 0
        %742 = vmatpush1.bf16.xpose.msra.mxu0 0
        %743 = vmatprep.subr.bf16.mxu0 0
        %744 = vmatpush1.bf16.xpose.msra.mxu0 0
        %745 = vmatprep.subr.bf16.mxu0 0
        %746 = vmatpush1.bf16.xpose.msra.mxu0 0
        %747 = vmatprep.subr.bf16.mxu0 0
        %748 = vmatpush1.bf16.xpose.msra.mxu0 0
        %749 = vmatprep.subr.bf16.mxu0 0
        %750 = vmatpush1.bf16.xpose.msra.mxu0 0
        %751 = vmatprep.subr.bf16.mxu0 0
        %752 = vmatpush1.bf16.xpose.msra.mxu0 0
        %753 = vmatprep.subr.bf16.mxu0 0
        %754 = vmatpush1.bf16.xpose.msra.mxu0 0
        %755 = vmatprep.subr.bf16.mxu0 0
        %756 = vmatpush1.bf16.xpose.msra.mxu0 0
        %757 = vmatprep.subr.bf16.mxu0 0
        %758 = vmatpush1.bf16.xpose.msra.mxu0 0
        %759 = vmatprep.mubr.bf16.mxu0 0
        %760 = vmatmul.mubr.bf16.gmra.mrb[0].mxu0 %v722
        %v761 = vpop.f32.mrb[0].mxu0
        %v762 = vadd.f32 0.0, %v761
        %v763 = vpop.f32.mrb[0].mxu0
        %v764 = vpop.f32.mrb[0].mxu0
        %v765 = vpop.f32.mrb[0].mxu0
        %766 = vdwg.mxu0
        %v767 = vsel %vm602, %v762, -inf
        %768 = vmax.xlane.f32.xlu0 %v767
        %v769 = vpop.xlane.xlu0 %768
        %v770 = vsub.f32 %v762, %v769
        %v771 = vmul.f32 %v770, 1.442695
        %v772 = vpow.pop %v771
        %v773 = vsel %vm602, %v772, 0.0
        %774 = vadd.xlane.f32.xlu0 %v773
        %v775 = vpop.xlane.xlu0 %774
        %v776 = vpack.c.bf16 %v772, %v772
        %777 = vrot.lane.b32.xlu0 %v661, 88
        %v778 = vpop.permute.xlu0 %777
        %v780 = vsel %vm602, %v776, 0
        %v783 = vsel %vm667, %v778, 0
        %785 = vmatprep.subr.bf16.mxu0 0
        %786 = vmatpush1.bf16.msra.mxu0 %v783
        %787 = vmatprep.subr.bf16.mxu0 0
        %788 = vmatpush1.bf16.msra.mxu0 0
        %789 = vmatprep.subr.bf16.mxu0 0
        %790 = vmatpush1.bf16.msra.mxu0 0
        %791 = vmatprep.subr.bf16.mxu0 0
        %792 = vmatpush1.bf16.msra.mxu0 0
        %793 = vmatprep.subr.bf16.mxu0 0
        %794 = vmatpush1.bf16.msra.mxu0 0
        %795 = vmatprep.subr.bf16.mxu0 0
        %796 = vmatpush1.bf16.msra.mxu0 0
        %797 = vmatprep.subr.bf16.mxu0 0
        %798 = vmatpush1.bf16.msra.mxu0 0
        %799 = vmatprep.subr.bf16.mxu0 0
        %800 = vmatpush1.bf16.msra.mxu0 0
        %801 = vmatprep.subr.bf16.mxu0 0
        %802 = vmatpush1.bf16.msra.mxu0 0
        %803 = vmatprep.subr.bf16.mxu0 0
        %804 = vmatpush1.bf16.msra.mxu0 0
        %805 = vmatprep.subr.bf16.mxu0 0
        %806 = vmatpush1.bf16.msra.mxu0 0
        %807 = vmatprep.subr.bf16.mxu0 0
        %808 = vmatpush1.bf16.msra.mxu0 0
        %809 = vmatprep.subr.bf16.mxu0 0
        %810 = vmatpush1.bf16.msra.mxu0 0
        %811 = vmatprep.subr.bf16.mxu0 0
        %812 = vmatpush1.bf16.msra.mxu0 0
        %813 = vmatprep.subr.bf16.mxu0 0
        %814 = vmatpush1.bf16.msra.mxu0 0
        %815 = vmatprep.subr.bf16.mxu0 0
        %816 = vmatpush1.bf16.msra.mxu0 0
        %817 = vmatprep.mubr.bf16.mxu0 0
        %818 = vmatmul.mubr.bf16.gmra.mrb[0].mxu0 %v780
        %v819 = vpop.f32.mrb[0].mxu0
        %v820 = vadd.f32 0.0, %v819
        %v821 = vpop.f32.mrb[0].mxu0
        %v822 = vpop.f32.mrb[0].mxu0
        %v823 = vpop.f32.mrb[0].mxu0
        %824 = vdwg.mxu0
        %v825 = vrcp.pop %v775
        %v826 = vmul.f32 %v820, %v825
        %v827 = vpack.c.bf16 %v826, %v826
        %v829 = vunpack.c.l.b16 %v827
        %v830 = vpack.c.b16 %v829, %v829
        %831 = vrot.lane.b32.xlu0 %v830, 8
        %v832 = vpop.permute.xlu0 %831
        %vm834 = vcmask 126016
        %835 = vst.msk [vmem:[#allocation3] sm:$0xf] %vm834, %v832
        %836 = vrot.lane.b32.xlu0 %v600, 112
        %v837 = vpop.permute.xlu0 %836
        %838 = vrot.lane.b32.xlu0 %v661, 112
        %v839 = vpop.permute.xlu0 %838
        %v841 = vsel %vm602, %v837, 0
        %v844 = vsel %vm602, %v839, 0
        %846 = vmatprep.subr.bf16.mxu0 0
        %847 = vmatpush1.bf16.xpose.msra.mxu0 %v844
        %848 = vmatprep.subr.bf16.mxu0 0
        %849 = vmatpush1.bf16.xpose.msra.mxu0 0
        %850 = vmatprep.subr.bf16.mxu0 0
        %851 = vmatpush1.bf16.xpose.msra.mxu0 0
        %852 = vmatprep.subr.bf16.mxu0 0
        %853 = vmatpush1.bf16.xpose.msra.mxu0 0
        %854 = vmatprep.subr.bf16.mxu0 0
        %855 = vmatpush1.bf16.xpose.msra.mxu0 0
        %856 = vmatprep.subr.bf16.mxu0 0
        %857 = vmatpush1.bf16.xpose.msra.mxu0 0
        %858 = vmatprep.subr.bf16.mxu0 0
        %859 = vmatpush1.bf16.xpose.msra.mxu0 0
        %860 = vmatprep.subr.bf16.mxu0 0
        %861 = vmatpush1.bf16.xpose.msra.mxu0 0
        %862 = vmatprep.subr.bf16.mxu0 0
        %863 = vmatpush1.bf16.xpose.msra.mxu0 0
        %864 = vmatprep.subr.bf16.mxu0 0
        %865 = vmatpush1.bf16.xpose.msra.mxu0 0
        %866 = vmatprep.subr.bf16.mxu0 0
        %867 = vmatpush1.bf16.xpose.msra.mxu0 0
        %868 = vmatprep.subr.bf16.mxu0 0
        %869 = vmatpush1.bf16.xpose.msra.mxu0 0
        %870 = vmatprep.subr.bf16.mxu0 0
        %871 = vmatpush1.bf16.xpose.msra.mxu0 0
        %872 = vmatprep.subr.bf16.mxu0 0
        %873 = vmatpush1.bf16.xpose.msra.mxu0 0
        %874 = vmatprep.subr.bf16.mxu0 0
        %875 = vmatpush1.bf16.xpose.msra.mxu0 0
        %876 = vmatprep.subr.bf16.mxu0 0
        %877 = vmatpush1.bf16.xpose.msra.mxu0 0
        %878 = vmatprep.mubr.bf16.mxu0 0
        %879 = vmatmul.mubr.bf16.gmra.mrb[0].mxu0 %v841
        %v880 = vpop.f32.mrb[0].mxu0
        %v881 = vadd.f32 0.0, %v880
        %v882 = vpop.f32.mrb[0].mxu0
        %v883 = vpop.f32.mrb[0].mxu0
        %v884 = vpop.f32.mrb[0].mxu0
        %885 = vdwg.mxu0
        %v886 = vsel %vm602, %v881, -inf
        %887 = vmax.xlane.f32.xlu0 %v886
        %v888 = vpop.xlane.xlu0 %887
        %v889 = vsub.f32 %v881, %v888
        %v890 = vmul.f32 %v889, 1.442695
        %v891 = vpow.pop %v890
        %v892 = vsel %vm602, %v891, 0.0
        %893 = vadd.xlane.f32.xlu0 %v892
        %v894 = vpop.xlane.xlu0 %893
        %v895 = vpack.c.bf16 %v891, %v891
        %896 = vrot.lane.b32.xlu0 %v661, 80
        %v897 = vpop.permute.xlu0 %896
        %v899 = vsel %vm602, %v895, 0
        %v902 = vsel %vm667, %v897, 0
        %904 = vmatprep.subr.bf16.mxu0 0
        %905 = vmatpush1.bf16.msra.mxu0 %v902
        %906 = vmatprep.subr.bf16.mxu0 0
        %907 = vmatpush1.bf16.msra.mxu0 0
        %908 = vmatprep.subr.bf16.mxu0 0
        %909 = vmatpush1.bf16.msra.mxu0 0
        %910 = vmatprep.subr.bf16.mxu0 0
        %911 = vmatpush1.bf16.msra.mxu0 0
        %912 = vmatprep.subr.bf16.mxu0 0
        %913 = vmatpush1.bf16.msra.mxu0 0
        %914 = vmatprep.subr.bf16.mxu0 0
        %915 = vmatpush1.bf16.msra.mxu0 0
        %916 = vmatprep.subr.bf16.mxu0 0
        %917 = vmatpush1.bf16.msra.mxu0 0
        %918 = vmatprep.subr.bf16.mxu0 0
        %919 = vmatpush1.bf16.msra.mxu0 0
        %920 = vmatprep.subr.bf16.mxu0 0
        %921 = vmatpush1.bf16.msra.mxu0 0
        %922 = vmatprep.subr.bf16.mxu0 0
        %923 = vmatpush1.bf16.msra.mxu0 0
        %924 = vmatprep.subr.bf16.mxu0 0
        %925 = vmatpush1.bf16.msra.mxu0 0
        %926 = vmatprep.subr.bf16.mxu0 0
        %927 = vmatpush1.bf16.msra.mxu0 0
        %928 = vmatprep.subr.bf16.mxu0 0
        %929 = vmatpush1.bf16.msra.mxu0 0
        %930 = vmatprep.subr.bf16.mxu0 0
        %931 = vmatpush1.bf16.msra.mxu0 0
        %932 = vmatprep.subr.bf16.mxu0 0
        %933 = vmatpush1.bf16.msra.mxu0 0
        %934 = vmatprep.subr.bf16.mxu0 0
        %935 = vmatpush1.bf16.msra.mxu0 0
        %936 = vmatprep.mubr.bf16.mxu0 0
        %937 = vmatmul.mubr.bf16.gmra.mrb[0].mxu0 %v899
        %v938 = vpop.f32.mrb[0].mxu0
        %v939 = vadd.f32 0.0, %v938
        %v940 = vpop.f32.mrb[0].mxu0
        %v941 = vpop.f32.mrb[0].mxu0
        %v942 = vpop.f32.mrb[0].mxu0
        %943 = vdwg.mxu0
        %v944 = vrcp.pop %v894
        %v945 = vmul.f32 %v939, %v944
        %v946 = vpack.c.bf16 %v945, %v945
        %v948 = vunpack.c.l.b16 %v946
        %v949 = vpack.c.b16 %v948, %v948
        %950 = vrot.lane.b32.xlu0 %v949, 16
        %v951 = vpop.permute.xlu0 %950
        %vm953 = vcmask 191616
        %954 = vst.msk [vmem:[#allocation3] sm:$0xf] %vm953, %v951
        %955 = vrot.lane.b32.xlu0 %v600, 104
        %v956 = vpop.permute.xlu0 %955
        %957 = vrot.lane.b32.xlu0 %v661, 104
        %v958 = vpop.permute.xlu0 %957
        %v960 = vsel %vm602, %v956, 0
        %v963 = vsel %vm602, %v958, 0
        %965 = vmatprep.subr.bf16.mxu0 0
        %966 = vmatpush1.bf16.xpose.msra.mxu0 %v963
        %967 = vmatprep.subr.bf16.mxu0 0
        %968 = vmatpush1.bf16.xpose.msra.mxu0 0
        %969 = vmatprep.subr.bf16.mxu0 0
        %970 = vmatpush1.bf16.xpose.msra.mxu0 0
        %971 = vmatprep.subr.bf16.mxu0 0
        %972 = vmatpush1.bf16.xpose.msra.mxu0 0
        %973 = vmatprep.subr.bf16.mxu0 0
        %974 = vmatpush1.bf16.xpose.msra.mxu0 0
        %975 = vmatprep.subr.bf16.mxu0 0
        %976 = vmatpush1.bf16.xpose.msra.mxu0 0
        %977 = vmatprep.subr.bf16.mxu0 0
        %978 = vmatpush1.bf16.xpose.msra.mxu0 0
        %979 = vmatprep.subr.bf16.mxu0 0
        %980 = vmatpush1.bf16.xpose.msra.mxu0 0
        %981 = vmatprep.subr.bf16.mxu0 0
        %982 = vmatpush1.bf16.xpose.msra.mxu0 0
        %983 = vmatprep.subr.bf16.mxu0 0
        %984 = vmatpush1.bf16.xpose.msra.mxu0 0
        %985 = vmatprep.subr.bf16.mxu0 0
        %986 = vmatpush1.bf16.xpose.msra.mxu0 0
        %987 = vmatprep.subr.bf16.mxu0 0
        %988 = vmatpush1.bf16.xpose.msra.mxu0 0
        %989 = vmatprep.subr.bf16.mxu0 0
        %990 = vmatpush1.bf16.xpose.msra.mxu0 0
        %991 = vmatprep.subr.bf16.mxu0 0
        %992 = vmatpush1.bf16.xpose.msra.mxu0 0
        %993 = vmatprep.subr.bf16.mxu0 0
        %994 = vmatpush1.bf16.xpose.msra.mxu0 0
        %995 = vmatprep.subr.bf16.mxu0 0
        %996 = vmatpush1.bf16.xpose.msra.mxu0 0
        %997 = vmatprep.mubr.bf16.mxu0 0
        %998 = vmatmul.mubr.bf16.gmra.mrb[0].mxu0 %v960
        %v999 = vpop.f32.mrb[0].mxu0
        %v1000 = vadd.f32 0.0, %v999
        %v1001 = vpop.f32.mrb[0].mxu0
        %v1002 = vpop.f32.mrb[0].mxu0
        %v1003 = vpop.f32.mrb[0].mxu0
        %1004 = vdwg.mxu0
        %v1005 = vsel %vm602, %v1000, -inf
        %1006 = vmax.xlane.f32.xlu0 %v1005
        %v1007 = vpop.xlane.xlu0 %1006
        %v1008 = vsub.f32 %v1000, %v1007
        %v1009 = vmul.f32 %v1008, 1.442695
        %v1010 = vpow.pop %v1009
        %v1011 = vsel %vm602, %v1010, 0.0
        %1012 = vadd.xlane.f32.xlu0 %v1011
        %v1013 = vpop.xlane.xlu0 %1012
        %v1014 = vpack.c.bf16 %v1010, %v1010
        %1015 = vrot.lane.b32.xlu0 %v661, 72
        %v1016 = vpop.permute.xlu0 %1015
        %v1018 = vsel %vm602, %v1014, 0
        %v1021 = vsel %vm667, %v1016, 0
        %1023 = vmatprep.subr.bf16.mxu0 0
        %1024 = vmatpush1.bf16.msra.mxu0 %v1021
        %1025 = vmatprep.subr.bf16.mxu0 0
        %1026 = vmatpush1.bf16.msra.mxu0 0
        %1027 = vmatprep.subr.bf16.mxu0 0
        %1028 = vmatpush1.bf16.msra.mxu0 0
        %1029 = vmatprep.subr.bf16.mxu0 0
        %1030 = vmatpush1.bf16.msra.mxu0 0
        %1031 = vmatprep.subr.bf16.mxu0 0
        %1032 = vmatpush1.bf16.msra.mxu0 0
        %1033 = vmatprep.subr.bf16.mxu0 0
        %1034 = vmatpush1.bf16.msra.mxu0 0
        %1035 = vmatprep.subr.bf16.mxu0 0
        %1036 = vmatpush1.bf16.msra.mxu0 0
        %1037 = vmatprep.subr.bf16.mxu0 0
        %1038 = vmatpush1.bf16.msra.mxu0 0
        %1039 = vmatprep.subr.bf16.mxu0 0
        %1040 = vmatpush1.bf16.msra.mxu0 0
        %1041 = vmatprep.subr.bf16.mxu0 0
        %1042 = vmatpush1.bf16.msra.mxu0 0
        %1043 = vmatprep.subr.bf16.mxu0 0
        %1044 = vmatpush1.bf16.msra.mxu0 0
        %1045 = vmatprep.subr.bf16.mxu0 0
        %1046 = vmatpush1.bf16.msra.mxu0 0
        %1047 = vmatprep.subr.bf16.mxu0 0
        %1048 = vmatpush1.bf16.msra.mxu0 0
        %1049 = vmatprep.subr.bf16.mxu0 0
        %1050 = vmatpush1.bf16.msra.mxu0 0
        %1051 = vmatprep.subr.bf16.mxu0 0
        %1052 = vmatpush1.bf16.msra.mxu0 0
        %1053 = vmatprep.subr.bf16.mxu0 0
        %1054 = vmatpush1.bf16.msra.mxu0 0
        %1055 = vmatprep.mubr.bf16.mxu0 0
        %1056 = vmatmul.mubr.bf16.gmra.mrb[0].mxu0 %v1018
        %v1057 = vpop.f32.mrb[0].mxu0
        %v1058 = vadd.f32 0.0, %v1057
        %v1059 = vpop.f32.mrb[0].mxu0
        %v1060 = vpop.f32.mrb[0].mxu0
        %v1061 = vpop.f32.mrb[0].mxu0
        %1062 = vdwg.mxu0
        %v1063 = vrcp.pop %v1013
        %v1064 = vmul.f32 %v1058, %v1063
        %v1065 = vpack.c.bf16 %v1064, %v1064
        %v1067 = vunpack.c.l.b16 %v1065
        %v1068 = vpack.c.b16 %v1067, %v1067
        %1069 = vrot.lane.b32.xlu0 %v1068, 24
        %v1070 = vpop.permute.xlu0 %1069
        %vm1072 = vcmask 257216
        %1073 = vst.msk [vmem:[#allocation3] sm:$0xf] %vm1072, %v1070
        %v1074 = vld [vmem:[#allocation3] sm:$0xf]
        %v1075 = vld [vmem:[#allocation15] sm:$0xf]
        %v1076 = vld [vmem:[#allocation15 + $0x4] sm:$0xf]
        %v1077 = vld [vmem:[#allocation15 + $0x8] sm:$0xf]
        %v1078 = vld [vmem:[#allocation15 + $0xc] sm:$0xf]
        %v1079 = vld [vmem:[#allocation16] sm:$0x1]
        %v1081 = vlaneseq
        %v1082 = vshrl.u32 %v1081, 7
        %v1083 = vsub.s32 0, %v1082
        %v1084 = vrot.slane %v1079, %v1083
        %v1090 = vunpack.c.l.b16 %v1075
        %v1091 = vunpack.c.l.b16 %v1076
        %v1092 = vunpack.c.l.b16 %v1077
        %v1093 = vunpack.c.l.b16 %v1078
        %v1094 = vpack.c.b16 %v1091, %v1090
        %v1095 = vpack.c.b16 %v1093, %v1092
        %v1099 = vsel %vm556, %v1074, 0
        %1101 = vmatprep.subr.bf16.mxu0 0
        %1102 = vmatpush1.bf16.msra.mxu0 %v1094
        %1103 = vmatprep.subr.bf16.mxu0 0
        %1104 = vmatpush1.bf16.msra.mxu0 %v1095
        %1105 = vmatprep.subr.bf16.mxu0 0
        %1106 = vmatpush1.bf16.msra.mxu0 0
        %1107 = vmatprep.subr.bf16.mxu0 0
        %1108 = vmatpush1.bf16.msra.mxu0 0
        %1109 = vmatprep.subr.bf16.mxu0 0
        %1110 = vmatpush1.bf16.msra.mxu0 0
        %1111 = vmatprep.subr.bf16.mxu0 0
        %1112 = vmatpush1.bf16.msra.mxu0 0
        %1113 = vmatprep.subr.bf16.mxu0 0
        %1114 = vmatpush1.bf16.msra.mxu0 0
        %1115 = vmatprep.subr.bf16.mxu0 0
        %1116 = vmatpush1.bf16.msra.mxu0 0
        %1117 = vmatprep.subr.bf16.mxu0 0
        %1118 = vmatpush1.bf16.msra.mxu0 0
        %1119 = vmatprep.subr.bf16.mxu0 0
        %1120 = vmatpush1.bf16.msra.mxu0 0
        %1121 = vmatprep.subr.bf16.mxu0 0
        %1122 = vmatpush1.bf16.msra.mxu0 0
        %1123 = vmatprep.subr.bf16.mxu0 0
        %1124 = vmatpush1.bf16.msra.mxu0 0
        %1125 = vmatprep.subr.bf16.mxu0 0
        %1126 = vmatpush1.bf16.msra.mxu0 0
        %1127 = vmatprep.subr.bf16.mxu0 0
        %1128 = vmatpush1.bf16.msra.mxu0 0
        %1129 = vmatprep.subr.bf16.mxu0 0
        %1130 = vmatpush1.bf16.msra.mxu0 0
        %1131 = vmatprep.subr.bf16.mxu0 0
        %1132 = vmatpush1.bf16.msra.mxu0 0
        %1133 = vmatprep.mubr.bf16.mxu0 0
        %1134 = vmatmul.mubr.bf16.gmra.mrb[0].mxu0 %v1099
        %v1135 = vpop.f32.mrb[0].mxu0
        %v1136 = vadd.f32 %v1084, %v1135
        %v1137 = vpop.f32.mrb[0].mxu0
        %v1138 = vpop.f32.mrb[0].mxu0
        %v1139 = vpop.f32.mrb[0].mxu0
        %1140 = vdwg.mxu0
        %1141 = vst.msk [vmem:[%s455] sm:$0xff] %vm556, %v1136
        %s1142 = sand.u32 %s233, 1
        %s1143 = scalar_lea.sflag [#allocation6], %s1142
        %s1144 = sand.u32 %s233, 1
        %s1145 = smul.addr %s1144, 8
        %s1146 = scalar_lea.vmem [#allocation18], %s1145
        // Predicated region
        $region89: #{tpu_custom_call.1} parent=51 // pred_check
          %p1147 = pneg %p243
        $region90: #{tpu_custom_call.1} parent=51 // pred_check_branch
          %1149 = sbr.rel (%p1147) target = $region92
        $region91: #{tpu_custom_call.1} parent=51 // pred_region
          %s1151 = ssub.s32 128, 128
          %1152 = vsyncadd %s1143, %s1151
          %s1153 = sadd.s32 %s36, %s35
          %s1154 = smul.addr %s1153, 128
          %s1155 = scalar_lea.hbm %s8, %s1154
          %s1157 = sshll.u32 %s1146, 4
          %s1158 = int_to_ptr.vmem [resolvable:$true] %s1157
          %1160 = dma.vmem_to_hbm [thread:$0]  %s1158, 128, %s1155, %s1143
        $region92: #{tpu_custom_call.1} parent=51 // pred_fallthru
          _
      $region52: #{tpu_custom_call.1} parent=5 // pred_fallthru
        _
      %p1161 = scmp.le.s32.totalorder 2, %s26
      // Predicated region
      $region93: #{tpu_custom_call.1} parent=5 // pred_check
        %p1162 = pneg %p1161
      $region94: #{tpu_custom_call.1} parent=5 // pred_check_branch
        %1164 = sbr.rel (%p1162) target = $region96
      $region95: #{tpu_custom_call.1} parent=5 // pred_region
        %s1165 = ssub.s32 %s26, 2
        // Predicated region
        $region97: #{tpu_custom_call.1} parent=95 // pred_check
          %p1166 = pneg %p249
        $region98: #{tpu_custom_call.1} parent=95 // pred_check_branch
          %1168 = sbr.rel (%p1166) target = $region100
        $region99: #{tpu_custom_call.1} parent=95 // pred_region
          %s1169 = sand.u32 %s234, 1
          %s1170 = scalar_lea.sflag [#allocation6], %s1169
          %s1171 = sand.u32 %s234, 1
          %s1172 = smul.addr %s1171, 8
          %s1173 = scalar_lea.vmem [#allocation18], %s1172
          %1174 = dma.done %s1170, 128
        $region100: #{tpu_custom_call.1} parent=95 // pred_fallthru
          _
      $region96: #{tpu_custom_call.1} parent=5 // pred_fallthru
        _
    $region6: #{tpu_custom_call.1} parent=1 // loop_footer
      %s30 = sadd.s32 1, %s26
    $region7: #{tpu_custom_call.1} parent=1 // loop_footer_branch
      %25 = sbr.rel target = $region3
    $region8: #{tpu_custom_call.1} parent=1 // loop_exit
      _
    %1175 = vsyncpa [#allocation5], 1
    %s1176 = scalar_lea.sflag [#allocation5], 1
    %1177 = vsyncpa %s1176, 1
    %1178 = vsyncpa [#allocation8], 1
    %s1179 = scalar_lea.sflag [#allocation8], 1
    %1180 = vsyncpa %s1179, 1
    %1181 = vsyncpa [#allocation11], 1
    %1182 = vsyncpa [#allocation14], 1
    %1183 = vsyncpa [#allocation17], 1
    %1184 = vsyncpa [#allocation6], 1
    %s1185 = scalar_lea.sflag [#allocation6], 1
    %1186 = vsyncpa %s1185, 1

</llo_original>
